<compile_context>
chip_gen: v7x
topology: tpu7x:2x2x1
jax: 0.10.0
libtpu: 0.0.40
codegen_flags: <defaults>
</compile_context>

<pallas_src>
import functools

import jax
import jax.numpy as jnp
from jax.experimental import pallas as pl
from jax.experimental.pallas import tpu as pltpu

N_INPUTS = 256
TRANS_WIDTH = 16
K = 4
BATCH = 8
BN_EPS = 1e-5


def _bn_relu_fused(h, gamma, beta):
    """Training-mode BatchNorm1d + ReLU, one-pass stats, fused scale/shift."""
    inv_b = 1.0 / h.shape[0]
    mean = jnp.sum(h, axis=0, keepdims=True) * inv_b
    mean_sq = jnp.sum(h * h, axis=0, keepdims=True) * inv_b
    var = jnp.maximum(mean_sq - mean * mean, 0.0)  # guard tiny negative fp error
    scale = gamma * jax.lax.rsqrt(var + BN_EPS)
    shift = beta - mean * scale
    return jnp.maximum(h * scale + shift, 0.0)


def transformation_kernel(
    x_ref,        # (B, n_inputs)
    w1_ref,       # (K, n_inputs, trans_width)
    w2_ref,       # (K, trans_width, trans_width)
    w3_ref,       # (K, trans_width, n_inputs)
    bn_s_ref,     # (K, 4, trans_width)  rows: [gamma1, beta1, gamma2, beta2]
    bn_l_ref,     # (K, 2, n_inputs)     rows: [gamma3, beta3]
    o_ref,        # (B, n_inputs)
    *,
    num_blocks,
):
    x = x_ref[...].astype(jnp.float32)
    # Static unroll over the K residual blocks: gives the scheduler full
    # visibility across the 12 small matmuls / reductions.
    for k in range(num_blocks):
        bns = bn_s_ref[k]           # (4, trans_width)
        bnl = bn_l_ref[k]           # (2, n_inputs)
        g1, be1 = bns[0:1, :], bns[1:2, :]
        g2, be2 = bns[2:3, :], bns[3:4, :]
        g3, be3 = bnl[0:1, :], bnl[1:2, :]

        # Linear biases omitted: cancelled exactly by the following BN.
        h = jnp.dot(x, w1_ref[k], preferred_element_type=jnp.float32)
        h = _bn_relu_fused(h, g1, be1)
        h = jnp.dot(h, w2_ref[k], preferred_element_type=jnp.float32)
        h = _bn_relu_fused(h, g2, be2)
        h = jnp.dot(h, w3_ref[k], preferred_element_type=jnp.float32)
        h = _bn_relu_fused(h, g3, be3)
        x = h + x  # residual connection
    o_ref[...] = x.astype(o_ref.dtype)


def init_params(key, n_inputs=N_INPUTS, trans_width=TRANS_WIDTH, num_blocks=K):
    """Deterministic synthetic parameters matching the module's shapes.

    Returns (kernel_params, ref_biases): the kernel consumes only the packed
    bias-free parameters; the Linear biases are generated solely so the
    reference can demonstrate that bias-before-training-mode-BN is a no-op.
    """
    keys = jax.random.split(key, 6)

    def w(k, shape, fan_in):
        return jax.random.normal(k, shape, jnp.float32) / jnp.sqrt(fan_in)

    w1 = w(keys[0], (num_blocks, n_inputs, trans_width), n_inputs)
    w2 = w(keys[1], (num_blocks, trans_width, trans_width), trans_width)
    w3 = w(keys[2], (num_blocks, trans_width, n_inputs), trans_width)

    # BN affine params (torch init: gamma=1, beta=0), packed lane-dense.
    ones_s = jnp.ones((num_blocks, 1, trans_width), jnp.float32)
    zeros_s = jnp.zeros((num_blocks, 1, trans_width), jnp.float32)
    bn_small = jnp.concatenate([ones_s, zeros_s, ones_s, zeros_s], axis=1)  # (K,4,16)
    bn_large = jnp.concatenate(
        [jnp.ones((num_blocks, 1, n_inputs), jnp.float32),
         jnp.zeros((num_blocks, 1, n_inputs), jnp.float32)], axis=1)        # (K,2,256)

    # Reference-only Linear biases (cancelled by the following BatchNorm).
    b1 = 0.01 * jax.random.normal(keys[3], (num_blocks, 1, trans_width), jnp.float32)
    b2 = 0.01 * jax.random.normal(keys[4], (num_blocks, 1, trans_width), jnp.float32)
    b3 = 0.01 * jax.random.normal(keys[5], (num_blocks, 1, n_inputs), jnp.float32)

    kernel_params = (w1, w2, w3, bn_small, bn_large)
    ref_biases = (b1, b2, b3)
    return kernel_params, ref_biases


@jax.jit
def transformation(x, params):
    kernel = functools.partial(transformation_kernel, num_blocks=K)
    return pl.pallas_call(
        kernel,
        out_shape=jax.ShapeDtypeStruct(x.shape, x.dtype),
        in_specs=[pl.BlockSpec(memory_space=pltpu.MemorySpace.VMEM)] * (1 + len(params)),
        out_specs=pl.BlockSpec(memory_space=pltpu.MemorySpace.VMEM),
    )(x, *params)
    # NOTE: if the caller ever has many independent (B, n_inputs) inputs,
    # stack them and add a leading "parallel" grid axis (engages the second
    # TensorCore on v7x); at a single 8x256 input a grid only adds overhead.


def reference(x, kernel_params, biases):
    """Pure-JAX reference with the *original* module semantics (incl. Linear
    biases and two-pass BN stats) — proves the kernel's simplifications are
    exact identities."""
    w1, w2, w3, bn_s, bn_l = kernel_params
    b1, b2, b3 = biases
    x = x.astype(jnp.float32)

    def bn_relu(h, gamma, beta):
        mean = jnp.mean(h, axis=0, keepdims=True)
        var = jnp.mean((h - mean) ** 2, axis=0, keepdims=True)
        return jnp.maximum((h - mean) / jnp.sqrt(var + BN_EPS) * gamma + beta, 0.0)

    for k in range(K):
        h = bn_relu(x @ w1[k] + b1[k], bn_s[k, 0:1], bn_s[k, 1:2])
        h = bn_relu(h @ w2[k] + b2[k], bn_s[k, 2:3], bn_s[k, 3:4])
        h = bn_relu(h @ w3[k] + b3[k], bn_l[k, 0:1], bn_l[k, 1:2])
        x = h + x
    return x


if __name__ == "__main__":
    key = jax.random.PRNGKey(0)
    k_x, k_p = jax.random.split(key)
    x = jax.random.normal(k_x, (BATCH, N_INPUTS), jnp.float32)
    params, ref_biases = init_params(k_p)

    out = jax.block_until_ready(transformation(x, params))

    ref = reference(x, params, ref_biases)
    assert out.shape == (BATCH, N_INPUTS)
    assert jnp.allclose(out, ref, atol=1e-4, rtol=1e-4), (
        f"max abs err = {jnp.max(jnp.abs(out - ref))}"
    )
    print("KERNEL_OK")
</pallas_src>

<mosaic_0001>
module attributes {stable_mosaic.version = 11 : i64} {
  func.func @transformation_kernel(%arg0: memref<8x256xf32, #tpu.memory_space<vmem>>, %arg1: memref<4x256x16xf32, #tpu.memory_space<vmem>>, %arg2: memref<4x16x16xf32, #tpu.memory_space<vmem>>, %arg3: memref<4x16x256xf32, #tpu.memory_space<vmem>>, %arg4: memref<4x4x16xf32, #tpu.memory_space<vmem>>, %arg5: memref<4x2x256xf32, #tpu.memory_space<vmem>>, %arg6: memref<8x256xf32, #tpu.memory_space<vmem>>) attributes {dimension_semantics = [], scalar_prefetch = 0 : i64, scratch_operands = 0 : i64, tpu.core_type = #tpu.core_type<tc>} {
    %c0 = arith.constant 0 : index
    %c0_0 = arith.constant 0 : index
    %0 = vector.load %arg0[%c0, %c0_0] : memref<8x256xf32, #tpu.memory_space<vmem>>, vector<8x256xf32>
    %c0_1 = arith.constant 0 : index
    %c0_2 = arith.constant 0 : index
    %c0_3 = arith.constant 0 : index
    %1 = vector.load %arg4[%c0_1, %c0_2, %c0_3] : memref<4x4x16xf32, #tpu.memory_space<vmem>>, vector<1x4x16xf32>
    %2 = vector.shape_cast %1 : vector<1x4x16xf32> to vector<4x16xf32>
    %c0_4 = arith.constant 0 : index
    %c0_5 = arith.constant 0 : index
    %c0_6 = arith.constant 0 : index
    %3 = vector.load %arg5[%c0_4, %c0_5, %c0_6] : memref<4x2x256xf32, #tpu.memory_space<vmem>>, vector<1x2x256xf32>
    %4 = vector.shape_cast %3 : vector<1x2x256xf32> to vector<2x256xf32>
    %5 = vector.extract_strided_slice %2 {offsets = [0, 0], sizes = [1, 16], strides = [1, 1]} : vector<4x16xf32> to vector<1x16xf32>
    %6 = vector.extract_strided_slice %2 {offsets = [1, 0], sizes = [1, 16], strides = [1, 1]} : vector<4x16xf32> to vector<1x16xf32>
    %7 = vector.extract_strided_slice %2 {offsets = [2, 0], sizes = [1, 16], strides = [1, 1]} : vector<4x16xf32> to vector<1x16xf32>
    %8 = vector.extract_strided_slice %2 {offsets = [3, 0], sizes = [1, 16], strides = [1, 1]} : vector<4x16xf32> to vector<1x16xf32>
    %9 = vector.extract_strided_slice %4 {offsets = [0, 0], sizes = [1, 256], strides = [1, 1]} : vector<2x256xf32> to vector<1x256xf32>
    %10 = vector.extract_strided_slice %4 {offsets = [1, 0], sizes = [1, 256], strides = [1, 1]} : vector<2x256xf32> to vector<1x256xf32>
    %c0_7 = arith.constant 0 : index
    %c0_8 = arith.constant 0 : index
    %c0_9 = arith.constant 0 : index
    %11 = vector.load %arg1[%c0_7, %c0_8, %c0_9] : memref<4x256x16xf32, #tpu.memory_space<vmem>>, vector<1x256x16xf32>
    %12 = vector.shape_cast %11 : vector<1x256x16xf32> to vector<256x16xf32>
    %cst = arith.constant dense<0.000000e+00> : vector<8x16xf32>
    %13 = tpu.matmul %0, %12, %cst {dimension_numbers = #tpu.dot_dimension_numbers<[1], [0], [0], [1], [0, 0, 1, 1], [], []>} : vector<8x256xf32>, vector<256x16xf32>, vector<8x16xf32> -> vector<8x16xf32>
    %cst_10 = arith.constant dense<0.000000e+00> : vector<16xf32>
    %14 = vector.multi_reduction <add>, %13, %cst_10 [0] : vector<8x16xf32> to vector<16xf32>
    %15 = vector.shape_cast %14 : vector<16xf32> to vector<1x16xf32>
    %cst_11 = arith.constant 1.250000e-01 : f32
    %16 = vector.broadcast %cst_11 : f32 to vector<1x16xf32>
    %17 = arith.mulf %15, %16 : vector<1x16xf32>
    %18 = arith.mulf %13, %13 : vector<8x16xf32>
    %cst_12 = arith.constant dense<0.000000e+00> : vector<16xf32>
    %19 = vector.multi_reduction <add>, %18, %cst_12 [0] : vector<8x16xf32> to vector<16xf32>
    %20 = vector.shape_cast %19 : vector<16xf32> to vector<1x16xf32>
    %cst_13 = arith.constant 1.250000e-01 : f32
    %21 = vector.broadcast %cst_13 : f32 to vector<1x16xf32>
    %22 = arith.mulf %20, %21 : vector<1x16xf32>
    %23 = arith.mulf %17, %17 : vector<1x16xf32>
    %24 = arith.subf %22, %23 : vector<1x16xf32>
    %cst_14 = arith.constant 0.000000e+00 : f32
    %25 = vector.broadcast %cst_14 : f32 to vector<1x16xf32>
    %26 = arith.maximumf %24, %25 : vector<1x16xf32>
    %cst_15 = arith.constant 9.99999974E-6 : f32
    %27 = vector.broadcast %cst_15 : f32 to vector<1x16xf32>
    %28 = arith.addf %26, %27 : vector<1x16xf32>
    %29 = math.rsqrt %28 : vector<1x16xf32>
    %30 = arith.mulf %5, %29 : vector<1x16xf32>
    %31 = arith.mulf %17, %30 : vector<1x16xf32>
    %32 = arith.subf %6, %31 : vector<1x16xf32>
    %33 = vector.broadcast %30 : vector<1x16xf32> to vector<8x16xf32>
    %34 = arith.mulf %13, %33 : vector<8x16xf32>
    %35 = vector.broadcast %32 : vector<1x16xf32> to vector<8x16xf32>
    %36 = arith.addf %34, %35 : vector<8x16xf32>
    %cst_16 = arith.constant 0.000000e+00 : f32
    %37 = vector.broadcast %cst_16 : f32 to vector<8x16xf32>
    %38 = arith.maximumf %36, %37 : vector<8x16xf32>
    %c0_17 = arith.constant 0 : index
    %c0_18 = arith.constant 0 : index
    %c0_19 = arith.constant 0 : index
    %39 = vector.load %arg2[%c0_17, %c0_18, %c0_19] : memref<4x16x16xf32, #tpu.memory_space<vmem>>, vector<1x16x16xf32>
    %40 = vector.shape_cast %39 : vector<1x16x16xf32> to vector<16x16xf32>
    %cst_20 = arith.constant dense<0.000000e+00> : vector<8x16xf32>
    %41 = tpu.matmul %38, %40, %cst_20 {dimension_numbers = #tpu.dot_dimension_numbers<[1], [0], [0], [1], [0, 0, 1, 1], [], []>} : vector<8x16xf32>, vector<16x16xf32>, vector<8x16xf32> -> vector<8x16xf32>
    %cst_21 = arith.constant dense<0.000000e+00> : vector<16xf32>
    %42 = vector.multi_reduction <add>, %41, %cst_21 [0] : vector<8x16xf32> to vector<16xf32>
    %43 = vector.shape_cast %42 : vector<16xf32> to vector<1x16xf32>
    %cst_22 = arith.constant 1.250000e-01 : f32
    %44 = vector.broadcast %cst_22 : f32 to vector<1x16xf32>
    %45 = arith.mulf %43, %44 : vector<1x16xf32>
    %46 = arith.mulf %41, %41 : vector<8x16xf32>
    %cst_23 = arith.constant dense<0.000000e+00> : vector<16xf32>
    %47 = vector.multi_reduction <add>, %46, %cst_23 [0] : vector<8x16xf32> to vector<16xf32>
    %48 = vector.shape_cast %47 : vector<16xf32> to vector<1x16xf32>
    %cst_24 = arith.constant 1.250000e-01 : f32
    %49 = vector.broadcast %cst_24 : f32 to vector<1x16xf32>
    %50 = arith.mulf %48, %49 : vector<1x16xf32>
    %51 = arith.mulf %45, %45 : vector<1x16xf32>
    %52 = arith.subf %50, %51 : vector<1x16xf32>
    %cst_25 = arith.constant 0.000000e+00 : f32
    %53 = vector.broadcast %cst_25 : f32 to vector<1x16xf32>
    %54 = arith.maximumf %52, %53 : vector<1x16xf32>
    %cst_26 = arith.constant 9.99999974E-6 : f32
    %55 = vector.broadcast %cst_26 : f32 to vector<1x16xf32>
    %56 = arith.addf %54, %55 : vector<1x16xf32>
    %57 = math.rsqrt %56 : vector<1x16xf32>
    %58 = arith.mulf %7, %57 : vector<1x16xf32>
    %59 = arith.mulf %45, %58 : vector<1x16xf32>
    %60 = arith.subf %8, %59 : vector<1x16xf32>
    %61 = vector.broadcast %58 : vector<1x16xf32> to vector<8x16xf32>
    %62 = arith.mulf %41, %61 : vector<8x16xf32>
    %63 = vector.broadcast %60 : vector<1x16xf32> to vector<8x16xf32>
    %64 = arith.addf %62, %63 : vector<8x16xf32>
    %cst_27 = arith.constant 0.000000e+00 : f32
    %65 = vector.broadcast %cst_27 : f32 to vector<8x16xf32>
    %66 = arith.maximumf %64, %65 : vector<8x16xf32>
    %c0_28 = arith.constant 0 : index
    %c0_29 = arith.constant 0 : index
    %c0_30 = arith.constant 0 : index
    %67 = vector.load %arg3[%c0_28, %c0_29, %c0_30] : memref<4x16x256xf32, #tpu.memory_space<vmem>>, vector<1x16x256xf32>
    %68 = vector.shape_cast %67 : vector<1x16x256xf32> to vector<16x256xf32>
    %cst_31 = arith.constant dense<0.000000e+00> : vector<8x256xf32>
    %69 = tpu.matmul %66, %68, %cst_31 {dimension_numbers = #tpu.dot_dimension_numbers<[1], [0], [0], [1], [0, 0, 1, 1], [], []>} : vector<8x16xf32>, vector<16x256xf32>, vector<8x256xf32> -> vector<8x256xf32>
    %cst_32 = arith.constant dense<0.000000e+00> : vector<256xf32>
    %70 = vector.multi_reduction <add>, %69, %cst_32 [0] : vector<8x256xf32> to vector<256xf32>
    %71 = vector.shape_cast %70 : vector<256xf32> to vector<1x256xf32>
    %cst_33 = arith.constant 1.250000e-01 : f32
    %72 = vector.broadcast %cst_33 : f32 to vector<1x256xf32>
    %73 = arith.mulf %71, %72 : vector<1x256xf32>
    %74 = arith.mulf %69, %69 : vector<8x256xf32>
    %cst_34 = arith.constant dense<0.000000e+00> : vector<256xf32>
    %75 = vector.multi_reduction <add>, %74, %cst_34 [0] : vector<8x256xf32> to vector<256xf32>
    %76 = vector.shape_cast %75 : vector<256xf32> to vector<1x256xf32>
    %cst_35 = arith.constant 1.250000e-01 : f32
    %77 = vector.broadcast %cst_35 : f32 to vector<1x256xf32>
    %78 = arith.mulf %76, %77 : vector<1x256xf32>
    %79 = arith.mulf %73, %73 : vector<1x256xf32>
    %80 = arith.subf %78, %79 : vector<1x256xf32>
    %cst_36 = arith.constant 0.000000e+00 : f32
    %81 = vector.broadcast %cst_36 : f32 to vector<1x256xf32>
    %82 = arith.maximumf %80, %81 : vector<1x256xf32>
    %cst_37 = arith.constant 9.99999974E-6 : f32
    %83 = vector.broadcast %cst_37 : f32 to vector<1x256xf32>
    %84 = arith.addf %82, %83 : vector<1x256xf32>
    %85 = math.rsqrt %84 : vector<1x256xf32>
    %86 = arith.mulf %9, %85 : vector<1x256xf32>
    %87 = arith.mulf %73, %86 : vector<1x256xf32>
    %88 = arith.subf %10, %87 : vector<1x256xf32>
    %89 = vector.broadcast %86 : vector<1x256xf32> to vector<8x256xf32>
    %90 = arith.mulf %69, %89 : vector<8x256xf32>
    %91 = vector.broadcast %88 : vector<1x256xf32> to vector<8x256xf32>
    %92 = arith.addf %90, %91 : vector<8x256xf32>
    %cst_38 = arith.constant 0.000000e+00 : f32
    %93 = vector.broadcast %cst_38 : f32 to vector<8x256xf32>
    %94 = arith.maximumf %92, %93 : vector<8x256xf32>
    %95 = arith.addf %94, %0 : vector<8x256xf32>
    %c1 = arith.constant 1 : index
    %c0_39 = arith.constant 0 : index
    %c0_40 = arith.constant 0 : index
    %96 = vector.load %arg4[%c1, %c0_39, %c0_40] : memref<4x4x16xf32, #tpu.memory_space<vmem>>, vector<1x4x16xf32>
    %97 = vector.shape_cast %96 : vector<1x4x16xf32> to vector<4x16xf32>
    %c1_41 = arith.constant 1 : index
    %c0_42 = arith.constant 0 : index
    %c0_43 = arith.constant 0 : index
    %98 = vector.load %arg5[%c1_41, %c0_42, %c0_43] : memref<4x2x256xf32, #tpu.memory_space<vmem>>, vector<1x2x256xf32>
    %99 = vector.shape_cast %98 : vector<1x2x256xf32> to vector<2x256xf32>
    %100 = vector.extract_strided_slice %97 {offsets = [0, 0], sizes = [1, 16], strides = [1, 1]} : vector<4x16xf32> to vector<1x16xf32>
    %101 = vector.extract_strided_slice %97 {offsets = [1, 0], sizes = [1, 16], strides = [1, 1]} : vector<4x16xf32> to vector<1x16xf32>
    %102 = vector.extract_strided_slice %97 {offsets = [2, 0], sizes = [1, 16], strides = [1, 1]} : vector<4x16xf32> to vector<1x16xf32>
    %103 = vector.extract_strided_slice %97 {offsets = [3, 0], sizes = [1, 16], strides = [1, 1]} : vector<4x16xf32> to vector<1x16xf32>
    %104 = vector.extract_strided_slice %99 {offsets = [0, 0], sizes = [1, 256], strides = [1, 1]} : vector<2x256xf32> to vector<1x256xf32>
    %105 = vector.extract_strided_slice %99 {offsets = [1, 0], sizes = [1, 256], strides = [1, 1]} : vector<2x256xf32> to vector<1x256xf32>
    %c1_44 = arith.constant 1 : index
    %c0_45 = arith.constant 0 : index
    %c0_46 = arith.constant 0 : index
    %106 = vector.load %arg1[%c1_44, %c0_45, %c0_46] : memref<4x256x16xf32, #tpu.memory_space<vmem>>, vector<1x256x16xf32>
    %107 = vector.shape_cast %106 : vector<1x256x16xf32> to vector<256x16xf32>
    %cst_47 = arith.constant dense<0.000000e+00> : vector<8x16xf32>
    %108 = tpu.matmul %95, %107, %cst_47 {dimension_numbers = #tpu.dot_dimension_numbers<[1], [0], [0], [1], [0, 0, 1, 1], [], []>} : vector<8x256xf32>, vector<256x16xf32>, vector<8x16xf32> -> vector<8x16xf32>
    %cst_48 = arith.constant dense<0.000000e+00> : vector<16xf32>
    %109 = vector.multi_reduction <add>, %108, %cst_48 [0] : vector<8x16xf32> to vector<16xf32>
    %110 = vector.shape_cast %109 : vector<16xf32> to vector<1x16xf32>
    %cst_49 = arith.constant 1.250000e-01 : f32
    %111 = vector.broadcast %cst_49 : f32 to vector<1x16xf32>
    %112 = arith.mulf %110, %111 : vector<1x16xf32>
    %113 = arith.mulf %108, %108 : vector<8x16xf32>
    %cst_50 = arith.constant dense<0.000000e+00> : vector<16xf32>
    %114 = vector.multi_reduction <add>, %113, %cst_50 [0] : vector<8x16xf32> to vector<16xf32>
    %115 = vector.shape_cast %114 : vector<16xf32> to vector<1x16xf32>
    %cst_51 = arith.constant 1.250000e-01 : f32
    %116 = vector.broadcast %cst_51 : f32 to vector<1x16xf32>
    %117 = arith.mulf %115, %116 : vector<1x16xf32>
    %118 = arith.mulf %112, %112 : vector<1x16xf32>
    %119 = arith.subf %117, %118 : vector<1x16xf32>
    %cst_52 = arith.constant 0.000000e+00 : f32
    %120 = vector.broadcast %cst_52 : f32 to vector<1x16xf32>
    %121 = arith.maximumf %119, %120 : vector<1x16xf32>
    %cst_53 = arith.constant 9.99999974E-6 : f32
    %122 = vector.broadcast %cst_53 : f32 to vector<1x16xf32>
    %123 = arith.addf %121, %122 : vector<1x16xf32>
    %124 = math.rsqrt %123 : vector<1x16xf32>
    %125 = arith.mulf %100, %124 : vector<1x16xf32>
    %126 = arith.mulf %112, %125 : vector<1x16xf32>
    %127 = arith.subf %101, %126 : vector<1x16xf32>
    %128 = vector.broadcast %125 : vector<1x16xf32> to vector<8x16xf32>
    %129 = arith.mulf %108, %128 : vector<8x16xf32>
    %130 = vector.broadcast %127 : vector<1x16xf32> to vector<8x16xf32>
    %131 = arith.addf %129, %130 : vector<8x16xf32>
    %cst_54 = arith.constant 0.000000e+00 : f32
    %132 = vector.broadcast %cst_54 : f32 to vector<8x16xf32>
    %133 = arith.maximumf %131, %132 : vector<8x16xf32>
    %c1_55 = arith.constant 1 : index
    %c0_56 = arith.constant 0 : index
    %c0_57 = arith.constant 0 : index
    %134 = vector.load %arg2[%c1_55, %c0_56, %c0_57] : memref<4x16x16xf32, #tpu.memory_space<vmem>>, vector<1x16x16xf32>
    %135 = vector.shape_cast %134 : vector<1x16x16xf32> to vector<16x16xf32>
    %cst_58 = arith.constant dense<0.000000e+00> : vector<8x16xf32>
    %136 = tpu.matmul %133, %135, %cst_58 {dimension_numbers = #tpu.dot_dimension_numbers<[1], [0], [0], [1], [0, 0, 1, 1], [], []>} : vector<8x16xf32>, vector<16x16xf32>, vector<8x16xf32> -> vector<8x16xf32>
    %cst_59 = arith.constant dense<0.000000e+00> : vector<16xf32>
    %137 = vector.multi_reduction <add>, %136, %cst_59 [0] : vector<8x16xf32> to vector<16xf32>
    %138 = vector.shape_cast %137 : vector<16xf32> to vector<1x16xf32>
    %cst_60 = arith.constant 1.250000e-01 : f32
    %139 = vector.broadcast %cst_60 : f32 to vector<1x16xf32>
    %140 = arith.mulf %138, %139 : vector<1x16xf32>
    %141 = arith.mulf %136, %136 : vector<8x16xf32>
    %cst_61 = arith.constant dense<0.000000e+00> : vector<16xf32>
    %142 = vector.multi_reduction <add>, %141, %cst_61 [0] : vector<8x16xf32> to vector<16xf32>
    %143 = vector.shape_cast %142 : vector<16xf32> to vector<1x16xf32>
    %cst_62 = arith.constant 1.250000e-01 : f32
    %144 = vector.broadcast %cst_62 : f32 to vector<1x16xf32>
    %145 = arith.mulf %143, %144 : vector<1x16xf32>
    %146 = arith.mulf %140, %140 : vector<1x16xf32>
    %147 = arith.subf %145, %146 : vector<1x16xf32>
    %cst_63 = arith.constant 0.000000e+00 : f32
    %148 = vector.broadcast %cst_63 : f32 to vector<1x16xf32>
    %149 = arith.maximumf %147, %148 : vector<1x16xf32>
    %cst_64 = arith.constant 9.99999974E-6 : f32
    %150 = vector.broadcast %cst_64 : f32 to vector<1x16xf32>
    %151 = arith.addf %149, %150 : vector<1x16xf32>
    %152 = math.rsqrt %151 : vector<1x16xf32>
    %153 = arith.mulf %102, %152 : vector<1x16xf32>
    %154 = arith.mulf %140, %153 : vector<1x16xf32>
    %155 = arith.subf %103, %154 : vector<1x16xf32>
    %156 = vector.broadcast %153 : vector<1x16xf32> to vector<8x16xf32>
    %157 = arith.mulf %136, %156 : vector<8x16xf32>
    %158 = vector.broadcast %155 : vector<1x16xf32> to vector<8x16xf32>
    %159 = arith.addf %157, %158 : vector<8x16xf32>
    %cst_65 = arith.constant 0.000000e+00 : f32
    %160 = vector.broadcast %cst_65 : f32 to vector<8x16xf32>
    %161 = arith.maximumf %159, %160 : vector<8x16xf32>
    %c1_66 = arith.constant 1 : index
    %c0_67 = arith.constant 0 : index
    %c0_68 = arith.constant 0 : index
    %162 = vector.load %arg3[%c1_66, %c0_67, %c0_68] : memref<4x16x256xf32, #tpu.memory_space<vmem>>, vector<1x16x256xf32>
    %163 = vector.shape_cast %162 : vector<1x16x256xf32> to vector<16x256xf32>
    %cst_69 = arith.constant dense<0.000000e+00> : vector<8x256xf32>
    %164 = tpu.matmul %161, %163, %cst_69 {dimension_numbers = #tpu.dot_dimension_numbers<[1], [0], [0], [1], [0, 0, 1, 1], [], []>} : vector<8x16xf32>, vector<16x256xf32>, vector<8x256xf32> -> vector<8x256xf32>
    %cst_70 = arith.constant dense<0.000000e+00> : vector<256xf32>
    %165 = vector.multi_reduction <add>, %164, %cst_70 [0] : vector<8x256xf32> to vector<256xf32>
    %166 = vector.shape_cast %165 : vector<256xf32> to vector<1x256xf32>
    %cst_71 = arith.constant 1.250000e-01 : f32
    %167 = vector.broadcast %cst_71 : f32 to vector<1x256xf32>
    %168 = arith.mulf %166, %167 : vector<1x256xf32>
    %169 = arith.mulf %164, %164 : vector<8x256xf32>
    %cst_72 = arith.constant dense<0.000000e+00> : vector<256xf32>
    %170 = vector.multi_reduction <add>, %169, %cst_72 [0] : vector<8x256xf32> to vector<256xf32>
    %171 = vector.shape_cast %170 : vector<256xf32> to vector<1x256xf32>
    %cst_73 = arith.constant 1.250000e-01 : f32
    %172 = vector.broadcast %cst_73 : f32 to vector<1x256xf32>
    %173 = arith.mulf %171, %172 : vector<1x256xf32>
    %174 = arith.mulf %168, %168 : vector<1x256xf32>
    %175 = arith.subf %173, %174 : vector<1x256xf32>
    %cst_74 = arith.constant 0.000000e+00 : f32
    %176 = vector.broadcast %cst_74 : f32 to vector<1x256xf32>
    %177 = arith.maximumf %175, %176 : vector<1x256xf32>
    %cst_75 = arith.constant 9.99999974E-6 : f32
    %178 = vector.broadcast %cst_75 : f32 to vector<1x256xf32>
    %179 = arith.addf %177, %178 : vector<1x256xf32>
    %180 = math.rsqrt %179 : vector<1x256xf32>
    %181 = arith.mulf %104, %180 : vector<1x256xf32>
    %182 = arith.mulf %168, %181 : vector<1x256xf32>
    %183 = arith.subf %105, %182 : vector<1x256xf32>
    %184 = vector.broadcast %181 : vector<1x256xf32> to vector<8x256xf32>
    %185 = arith.mulf %164, %184 : vector<8x256xf32>
    %186 = vector.broadcast %183 : vector<1x256xf32> to vector<8x256xf32>
    %187 = arith.addf %185, %186 : vector<8x256xf32>
    %cst_76 = arith.constant 0.000000e+00 : f32
    %188 = vector.broadcast %cst_76 : f32 to vector<8x256xf32>
    %189 = arith.maximumf %187, %188 : vector<8x256xf32>
    %190 = arith.addf %189, %95 : vector<8x256xf32>
    %c2 = arith.constant 2 : index
    %c0_77 = arith.constant 0 : index
    %c0_78 = arith.constant 0 : index
    %191 = vector.load %arg4[%c2, %c0_77, %c0_78] : memref<4x4x16xf32, #tpu.memory_space<vmem>>, vector<1x4x16xf32>
    %192 = vector.shape_cast %191 : vector<1x4x16xf32> to vector<4x16xf32>
    %c2_79 = arith.constant 2 : index
    %c0_80 = arith.constant 0 : index
    %c0_81 = arith.constant 0 : index
    %193 = vector.load %arg5[%c2_79, %c0_80, %c0_81] : memref<4x2x256xf32, #tpu.memory_space<vmem>>, vector<1x2x256xf32>
    %194 = vector.shape_cast %193 : vector<1x2x256xf32> to vector<2x256xf32>
    %195 = vector.extract_strided_slice %192 {offsets = [0, 0], sizes = [1, 16], strides = [1, 1]} : vector<4x16xf32> to vector<1x16xf32>
    %196 = vector.extract_strided_slice %192 {offsets = [1, 0], sizes = [1, 16], strides = [1, 1]} : vector<4x16xf32> to vector<1x16xf32>
    %197 = vector.extract_strided_slice %192 {offsets = [2, 0], sizes = [1, 16], strides = [1, 1]} : vector<4x16xf32> to vector<1x16xf32>
    %198 = vector.extract_strided_slice %192 {offsets = [3, 0], sizes = [1, 16], strides = [1, 1]} : vector<4x16xf32> to vector<1x16xf32>
    %199 = vector.extract_strided_slice %194 {offsets = [0, 0], sizes = [1, 256], strides = [1, 1]} : vector<2x256xf32> to vector<1x256xf32>
    %200 = vector.extract_strided_slice %194 {offsets = [1, 0], sizes = [1, 256], strides = [1, 1]} : vector<2x256xf32> to vector<1x256xf32>
    %c2_82 = arith.constant 2 : index
    %c0_83 = arith.constant 0 : index
    %c0_84 = arith.constant 0 : index
    %201 = vector.load %arg1[%c2_82, %c0_83, %c0_84] : memref<4x256x16xf32, #tpu.memory_space<vmem>>, vector<1x256x16xf32>
    %202 = vector.shape_cast %201 : vector<1x256x16xf32> to vector<256x16xf32>
    %cst_85 = arith.constant dense<0.000000e+00> : vector<8x16xf32>
    %203 = tpu.matmul %190, %202, %cst_85 {dimension_numbers = #tpu.dot_dimension_numbers<[1], [0], [0], [1], [0, 0, 1, 1], [], []>} : vector<8x256xf32>, vector<256x16xf32>, vector<8x16xf32> -> vector<8x16xf32>
    %cst_86 = arith.constant dense<0.000000e+00> : vector<16xf32>
    %204 = vector.multi_reduction <add>, %203, %cst_86 [0] : vector<8x16xf32> to vector<16xf32>
    %205 = vector.shape_cast %204 : vector<16xf32> to vector<1x16xf32>
    %cst_87 = arith.constant 1.250000e-01 : f32
    %206 = vector.broadcast %cst_87 : f32 to vector<1x16xf32>
    %207 = arith.mulf %205, %206 : vector<1x16xf32>
    %208 = arith.mulf %203, %203 : vector<8x16xf32>
    %cst_88 = arith.constant dense<0.000000e+00> : vector<16xf32>
    %209 = vector.multi_reduction <add>, %208, %cst_88 [0] : vector<8x16xf32> to vector<16xf32>
    %210 = vector.shape_cast %209 : vector<16xf32> to vector<1x16xf32>
    %cst_89 = arith.constant 1.250000e-01 : f32
    %211 = vector.broadcast %cst_89 : f32 to vector<1x16xf32>
    %212 = arith.mulf %210, %211 : vector<1x16xf32>
    %213 = arith.mulf %207, %207 : vector<1x16xf32>
    %214 = arith.subf %212, %213 : vector<1x16xf32>
    %cst_90 = arith.constant 0.000000e+00 : f32
    %215 = vector.broadcast %cst_90 : f32 to vector<1x16xf32>
    %216 = arith.maximumf %214, %215 : vector<1x16xf32>
    %cst_91 = arith.constant 9.99999974E-6 : f32
    %217 = vector.broadcast %cst_91 : f32 to vector<1x16xf32>
    %218 = arith.addf %216, %217 : vector<1x16xf32>
    %219 = math.rsqrt %218 : vector<1x16xf32>
    %220 = arith.mulf %195, %219 : vector<1x16xf32>
    %221 = arith.mulf %207, %220 : vector<1x16xf32>
    %222 = arith.subf %196, %221 : vector<1x16xf32>
    %223 = vector.broadcast %220 : vector<1x16xf32> to vector<8x16xf32>
    %224 = arith.mulf %203, %223 : vector<8x16xf32>
    %225 = vector.broadcast %222 : vector<1x16xf32> to vector<8x16xf32>
    %226 = arith.addf %224, %225 : vector<8x16xf32>
    %cst_92 = arith.constant 0.000000e+00 : f32
    %227 = vector.broadcast %cst_92 : f32 to vector<8x16xf32>
    %228 = arith.maximumf %226, %227 : vector<8x16xf32>
    %c2_93 = arith.constant 2 : index
    %c0_94 = arith.constant 0 : index
    %c0_95 = arith.constant 0 : index
    %229 = vector.load %arg2[%c2_93, %c0_94, %c0_95] : memref<4x16x16xf32, #tpu.memory_space<vmem>>, vector<1x16x16xf32>
    %230 = vector.shape_cast %229 : vector<1x16x16xf32> to vector<16x16xf32>
    %cst_96 = arith.constant dense<0.000000e+00> : vector<8x16xf32>
    %231 = tpu.matmul %228, %230, %cst_96 {dimension_numbers = #tpu.dot_dimension_numbers<[1], [0], [0], [1], [0, 0, 1, 1], [], []>} : vector<8x16xf32>, vector<16x16xf32>, vector<8x16xf32> -> vector<8x16xf32>
    %cst_97 = arith.constant dense<0.000000e+00> : vector<16xf32>
    %232 = vector.multi_reduction <add>, %231, %cst_97 [0] : vector<8x16xf32> to vector<16xf32>
    %233 = vector.shape_cast %232 : vector<16xf32> to vector<1x16xf32>
    %cst_98 = arith.constant 1.250000e-01 : f32
    %234 = vector.broadcast %cst_98 : f32 to vector<1x16xf32>
    %235 = arith.mulf %233, %234 : vector<1x16xf32>
    %236 = arith.mulf %231, %231 : vector<8x16xf32>
    %cst_99 = arith.constant dense<0.000000e+00> : vector<16xf32>
    %237 = vector.multi_reduction <add>, %236, %cst_99 [0] : vector<8x16xf32> to vector<16xf32>
    %238 = vector.shape_cast %237 : vector<16xf32> to vector<1x16xf32>
    %cst_100 = arith.constant 1.250000e-01 : f32
    %239 = vector.broadcast %cst_100 : f32 to vector<1x16xf32>
    %240 = arith.mulf %238, %239 : vector<1x16xf32>
    %241 = arith.mulf %235, %235 : vector<1x16xf32>
    %242 = arith.subf %240, %241 : vector<1x16xf32>
    %cst_101 = arith.constant 0.000000e+00 : f32
    %243 = vector.broadcast %cst_101 : f32 to vector<1x16xf32>
    %244 = arith.maximumf %242, %243 : vector<1x16xf32>
    %cst_102 = arith.constant 9.99999974E-6 : f32
    %245 = vector.broadcast %cst_102 : f32 to vector<1x16xf32>
    %246 = arith.addf %244, %245 : vector<1x16xf32>
    %247 = math.rsqrt %246 : vector<1x16xf32>
    %248 = arith.mulf %197, %247 : vector<1x16xf32>
    %249 = arith.mulf %235, %248 : vector<1x16xf32>
    %250 = arith.subf %198, %249 : vector<1x16xf32>
    %251 = vector.broadcast %248 : vector<1x16xf32> to vector<8x16xf32>
    %252 = arith.mulf %231, %251 : vector<8x16xf32>
    %253 = vector.broadcast %250 : vector<1x16xf32> to vector<8x16xf32>
    %254 = arith.addf %252, %253 : vector<8x16xf32>
    %cst_103 = arith.constant 0.000000e+00 : f32
    %255 = vector.broadcast %cst_103 : f32 to vector<8x16xf32>
    %256 = arith.maximumf %254, %255 : vector<8x16xf32>
    %c2_104 = arith.constant 2 : index
    %c0_105 = arith.constant 0 : index
    %c0_106 = arith.constant 0 : index
    %257 = vector.load %arg3[%c2_104, %c0_105, %c0_106] : memref<4x16x256xf32, #tpu.memory_space<vmem>>, vector<1x16x256xf32>
    %258 = vector.shape_cast %257 : vector<1x16x256xf32> to vector<16x256xf32>
    %cst_107 = arith.constant dense<0.000000e+00> : vector<8x256xf32>
    %259 = tpu.matmul %256, %258, %cst_107 {dimension_numbers = #tpu.dot_dimension_numbers<[1], [0], [0], [1], [0, 0, 1, 1], [], []>} : vector<8x16xf32>, vector<16x256xf32>, vector<8x256xf32> -> vector<8x256xf32>
    %cst_108 = arith.constant dense<0.000000e+00> : vector<256xf32>
    %260 = vector.multi_reduction <add>, %259, %cst_108 [0] : vector<8x256xf32> to vector<256xf32>
    %261 = vector.shape_cast %260 : vector<256xf32> to vector<1x256xf32>
    %cst_109 = arith.constant 1.250000e-01 : f32
    %262 = vector.broadcast %cst_109 : f32 to vector<1x256xf32>
    %263 = arith.mulf %261, %262 : vector<1x256xf32>
    %264 = arith.mulf %259, %259 : vector<8x256xf32>
    %cst_110 = arith.constant dense<0.000000e+00> : vector<256xf32>
    %265 = vector.multi_reduction <add>, %264, %cst_110 [0] : vector<8x256xf32> to vector<256xf32>
    %266 = vector.shape_cast %265 : vector<256xf32> to vector<1x256xf32>
    %cst_111 = arith.constant 1.250000e-01 : f32
    %267 = vector.broadcast %cst_111 : f32 to vector<1x256xf32>
    %268 = arith.mulf %266, %267 : vector<1x256xf32>
    %269 = arith.mulf %263, %263 : vector<1x256xf32>
    %270 = arith.subf %268, %269 : vector<1x256xf32>
    %cst_112 = arith.constant 0.000000e+00 : f32
    %271 = vector.broadcast %cst_112 : f32 to vector<1x256xf32>
    %272 = arith.maximumf %270, %271 : vector<1x256xf32>
    %cst_113 = arith.constant 9.99999974E-6 : f32
    %273 = vector.broadcast %cst_113 : f32 to vector<1x256xf32>
    %274 = arith.addf %272, %273 : vector<1x256xf32>
    %275 = math.rsqrt %274 : vector<1x256xf32>
    %276 = arith.mulf %199, %275 : vector<1x256xf32>
    %277 = arith.mulf %263, %276 : vector<1x256xf32>
    %278 = arith.subf %200, %277 : vector<1x256xf32>
    %279 = vector.broadcast %276 : vector<1x256xf32> to vector<8x256xf32>
    %280 = arith.mulf %259, %279 : vector<8x256xf32>
    %281 = vector.broadcast %278 : vector<1x256xf32> to vector<8x256xf32>
    %282 = arith.addf %280, %281 : vector<8x256xf32>
    %cst_114 = arith.constant 0.000000e+00 : f32
    %283 = vector.broadcast %cst_114 : f32 to vector<8x256xf32>
    %284 = arith.maximumf %282, %283 : vector<8x256xf32>
    %285 = arith.addf %284, %190 : vector<8x256xf32>
    %c3 = arith.constant 3 : index
    %c0_115 = arith.constant 0 : index
    %c0_116 = arith.constant 0 : index
    %286 = vector.load %arg4[%c3, %c0_115, %c0_116] : memref<4x4x16xf32, #tpu.memory_space<vmem>>, vector<1x4x16xf32>
    %287 = vector.shape_cast %286 : vector<1x4x16xf32> to vector<4x16xf32>
    %c3_117 = arith.constant 3 : index
    %c0_118 = arith.constant 0 : index
    %c0_119 = arith.constant 0 : index
    %288 = vector.load %arg5[%c3_117, %c0_118, %c0_119] : memref<4x2x256xf32, #tpu.memory_space<vmem>>, vector<1x2x256xf32>
    %289 = vector.shape_cast %288 : vector<1x2x256xf32> to vector<2x256xf32>
    %290 = vector.extract_strided_slice %287 {offsets = [0, 0], sizes = [1, 16], strides = [1, 1]} : vector<4x16xf32> to vector<1x16xf32>
    %291 = vector.extract_strided_slice %287 {offsets = [1, 0], sizes = [1, 16], strides = [1, 1]} : vector<4x16xf32> to vector<1x16xf32>
    %292 = vector.extract_strided_slice %287 {offsets = [2, 0], sizes = [1, 16], strides = [1, 1]} : vector<4x16xf32> to vector<1x16xf32>
    %293 = vector.extract_strided_slice %287 {offsets = [3, 0], sizes = [1, 16], strides = [1, 1]} : vector<4x16xf32> to vector<1x16xf32>
    %294 = vector.extract_strided_slice %289 {offsets = [0, 0], sizes = [1, 256], strides = [1, 1]} : vector<2x256xf32> to vector<1x256xf32>
    %295 = vector.extract_strided_slice %289 {offsets = [1, 0], sizes = [1, 256], strides = [1, 1]} : vector<2x256xf32> to vector<1x256xf32>
    %c3_120 = arith.constant 3 : index
    %c0_121 = arith.constant 0 : index
    %c0_122 = arith.constant 0 : index
    %296 = vector.load %arg1[%c3_120, %c0_121, %c0_122] : memref<4x256x16xf32, #tpu.memory_space<vmem>>, vector<1x256x16xf32>
    %297 = vector.shape_cast %296 : vector<1x256x16xf32> to vector<256x16xf32>
    %cst_123 = arith.constant dense<0.000000e+00> : vector<8x16xf32>
    %298 = tpu.matmul %285, %297, %cst_123 {dimension_numbers = #tpu.dot_dimension_numbers<[1], [0], [0], [1], [0, 0, 1, 1], [], []>} : vector<8x256xf32>, vector<256x16xf32>, vector<8x16xf32> -> vector<8x16xf32>
    %cst_124 = arith.constant dense<0.000000e+00> : vector<16xf32>
    %299 = vector.multi_reduction <add>, %298, %cst_124 [0] : vector<8x16xf32> to vector<16xf32>
    %300 = vector.shape_cast %299 : vector<16xf32> to vector<1x16xf32>
    %cst_125 = arith.constant 1.250000e-01 : f32
    %301 = vector.broadcast %cst_125 : f32 to vector<1x16xf32>
    %302 = arith.mulf %300, %301 : vector<1x16xf32>
    %303 = arith.mulf %298, %298 : vector<8x16xf32>
    %cst_126 = arith.constant dense<0.000000e+00> : vector<16xf32>
    %304 = vector.multi_reduction <add>, %303, %cst_126 [0] : vector<8x16xf32> to vector<16xf32>
    %305 = vector.shape_cast %304 : vector<16xf32> to vector<1x16xf32>
    %cst_127 = arith.constant 1.250000e-01 : f32
    %306 = vector.broadcast %cst_127 : f32 to vector<1x16xf32>
    %307 = arith.mulf %305, %306 : vector<1x16xf32>
    %308 = arith.mulf %302, %302 : vector<1x16xf32>
    %309 = arith.subf %307, %308 : vector<1x16xf32>
    %cst_128 = arith.constant 0.000000e+00 : f32
    %310 = vector.broadcast %cst_128 : f32 to vector<1x16xf32>
    %311 = arith.maximumf %309, %310 : vector<1x16xf32>
    %cst_129 = arith.constant 9.99999974E-6 : f32
    %312 = vector.broadcast %cst_129 : f32 to vector<1x16xf32>
    %313 = arith.addf %311, %312 : vector<1x16xf32>
    %314 = math.rsqrt %313 : vector<1x16xf32>
    %315 = arith.mulf %290, %314 : vector<1x16xf32>
    %316 = arith.mulf %302, %315 : vector<1x16xf32>
    %317 = arith.subf %291, %316 : vector<1x16xf32>
    %318 = vector.broadcast %315 : vector<1x16xf32> to vector<8x16xf32>
    %319 = arith.mulf %298, %318 : vector<8x16xf32>
    %320 = vector.broadcast %317 : vector<1x16xf32> to vector<8x16xf32>
    %321 = arith.addf %319, %320 : vector<8x16xf32>
    %cst_130 = arith.constant 0.000000e+00 : f32
    %322 = vector.broadcast %cst_130 : f32 to vector<8x16xf32>
    %323 = arith.maximumf %321, %322 : vector<8x16xf32>
    %c3_131 = arith.constant 3 : index
    %c0_132 = arith.constant 0 : index
    %c0_133 = arith.constant 0 : index
    %324 = vector.load %arg2[%c3_131, %c0_132, %c0_133] : memref<4x16x16xf32, #tpu.memory_space<vmem>>, vector<1x16x16xf32>
    %325 = vector.shape_cast %324 : vector<1x16x16xf32> to vector<16x16xf32>
    %cst_134 = arith.constant dense<0.000000e+00> : vector<8x16xf32>
    %326 = tpu.matmul %323, %325, %cst_134 {dimension_numbers = #tpu.dot_dimension_numbers<[1], [0], [0], [1], [0, 0, 1, 1], [], []>} : vector<8x16xf32>, vector<16x16xf32>, vector<8x16xf32> -> vector<8x16xf32>
    %cst_135 = arith.constant dense<0.000000e+00> : vector<16xf32>
    %327 = vector.multi_reduction <add>, %326, %cst_135 [0] : vector<8x16xf32> to vector<16xf32>
    %328 = vector.shape_cast %327 : vector<16xf32> to vector<1x16xf32>
    %cst_136 = arith.constant 1.250000e-01 : f32
    %329 = vector.broadcast %cst_136 : f32 to vector<1x16xf32>
    %330 = arith.mulf %328, %329 : vector<1x16xf32>
    %331 = arith.mulf %326, %326 : vector<8x16xf32>
    %cst_137 = arith.constant dense<0.000000e+00> : vector<16xf32>
    %332 = vector.multi_reduction <add>, %331, %cst_137 [0] : vector<8x16xf32> to vector<16xf32>
    %333 = vector.shape_cast %332 : vector<16xf32> to vector<1x16xf32>
    %cst_138 = arith.constant 1.250000e-01 : f32
    %334 = vector.broadcast %cst_138 : f32 to vector<1x16xf32>
    %335 = arith.mulf %333, %334 : vector<1x16xf32>
    %336 = arith.mulf %330, %330 : vector<1x16xf32>
    %337 = arith.subf %335, %336 : vector<1x16xf32>
    %cst_139 = arith.constant 0.000000e+00 : f32
    %338 = vector.broadcast %cst_139 : f32 to vector<1x16xf32>
    %339 = arith.maximumf %337, %338 : vector<1x16xf32>
    %cst_140 = arith.constant 9.99999974E-6 : f32
    %340 = vector.broadcast %cst_140 : f32 to vector<1x16xf32>
    %341 = arith.addf %339, %340 : vector<1x16xf32>
    %342 = math.rsqrt %341 : vector<1x16xf32>
    %343 = arith.mulf %292, %342 : vector<1x16xf32>
    %344 = arith.mulf %330, %343 : vector<1x16xf32>
    %345 = arith.subf %293, %344 : vector<1x16xf32>
    %346 = vector.broadcast %343 : vector<1x16xf32> to vector<8x16xf32>
    %347 = arith.mulf %326, %346 : vector<8x16xf32>
    %348 = vector.broadcast %345 : vector<1x16xf32> to vector<8x16xf32>
    %349 = arith.addf %347, %348 : vector<8x16xf32>
    %cst_141 = arith.constant 0.000000e+00 : f32
    %350 = vector.broadcast %cst_141 : f32 to vector<8x16xf32>
    %351 = arith.maximumf %349, %350 : vector<8x16xf32>
    %c3_142 = arith.constant 3 : index
    %c0_143 = arith.constant 0 : index
    %c0_144 = arith.constant 0 : index
    %352 = vector.load %arg3[%c3_142, %c0_143, %c0_144] : memref<4x16x256xf32, #tpu.memory_space<vmem>>, vector<1x16x256xf32>
    %353 = vector.shape_cast %352 : vector<1x16x256xf32> to vector<16x256xf32>
    %cst_145 = arith.constant dense<0.000000e+00> : vector<8x256xf32>
    %354 = tpu.matmul %351, %353, %cst_145 {dimension_numbers = #tpu.dot_dimension_numbers<[1], [0], [0], [1], [0, 0, 1, 1], [], []>} : vector<8x16xf32>, vector<16x256xf32>, vector<8x256xf32> -> vector<8x256xf32>
    %cst_146 = arith.constant dense<0.000000e+00> : vector<256xf32>
    %355 = vector.multi_reduction <add>, %354, %cst_146 [0] : vector<8x256xf32> to vector<256xf32>
    %356 = vector.shape_cast %355 : vector<256xf32> to vector<1x256xf32>
    %cst_147 = arith.constant 1.250000e-01 : f32
    %357 = vector.broadcast %cst_147 : f32 to vector<1x256xf32>
    %358 = arith.mulf %356, %357 : vector<1x256xf32>
    %359 = arith.mulf %354, %354 : vector<8x256xf32>
    %cst_148 = arith.constant dense<0.000000e+00> : vector<256xf32>
    %360 = vector.multi_reduction <add>, %359, %cst_148 [0] : vector<8x256xf32> to vector<256xf32>
    %361 = vector.shape_cast %360 : vector<256xf32> to vector<1x256xf32>
    %cst_149 = arith.constant 1.250000e-01 : f32
    %362 = vector.broadcast %cst_149 : f32 to vector<1x256xf32>
    %363 = arith.mulf %361, %362 : vector<1x256xf32>
    %364 = arith.mulf %358, %358 : vector<1x256xf32>
    %365 = arith.subf %363, %364 : vector<1x256xf32>
    %cst_150 = arith.constant 0.000000e+00 : f32
    %366 = vector.broadcast %cst_150 : f32 to vector<1x256xf32>
    %367 = arith.maximumf %365, %366 : vector<1x256xf32>
    %cst_151 = arith.constant 9.99999974E-6 : f32
    %368 = vector.broadcast %cst_151 : f32 to vector<1x256xf32>
    %369 = arith.addf %367, %368 : vector<1x256xf32>
    %370 = math.rsqrt %369 : vector<1x256xf32>
    %371 = arith.mulf %294, %370 : vector<1x256xf32>
    %372 = arith.mulf %358, %371 : vector<1x256xf32>
    %373 = arith.subf %295, %372 : vector<1x256xf32>
    %374 = vector.broadcast %371 : vector<1x256xf32> to vector<8x256xf32>
    %375 = arith.mulf %354, %374 : vector<8x256xf32>
    %376 = vector.broadcast %373 : vector<1x256xf32> to vector<8x256xf32>
    %377 = arith.addf %375, %376 : vector<8x256xf32>
    %cst_152 = arith.constant 0.000000e+00 : f32
    %378 = vector.broadcast %cst_152 : f32 to vector<8x256xf32>
    %379 = arith.maximumf %377, %378 : vector<8x256xf32>
    %380 = arith.addf %379, %285 : vector<8x256xf32>
    %c0_153 = arith.constant 0 : index
    %c0_154 = arith.constant 0 : index
    %381 = vector.load %arg6[%c0_153, %c0_154] : memref<8x256xf32, #tpu.memory_space<vmem>>, vector<8x256xf32>
    tpu.vector_store %arg6[%c0_153, %c0_154], %380 {strides = array<i32>} : memref<8x256xf32, #tpu.memory_space<vmem>>, vector<8x256xf32>,
    return
  }
}

</mosaic_0001>

<llo_original>
// kernel: transformation.1
$region0: #{transformation.1}
  #allocation0 [shape = 'u32[]', space=smem, size = 0x4, offset = 0x4, fixed_abs, tag = 'smem constant byte address 0x4 - core index']
  #allocation1 [shape = 'u32[144,128]{1,0:T(1,128)}', space=vmem, size = 0x12000, scoped, tag = 'internal scratch']
  %s0 = inlined_call_operand.vmem [shape: f32[8,256], index: 0, kind: input, shape index: {}]
  %s1 = inlined_call_operand.vmem [shape: f32[4,256,16], index: 1, kind: input, shape index: {}]
  %s2 = inlined_call_operand.vmem [shape: f32[4,16,16], index: 2, kind: input, shape index: {}]
  %s3 = inlined_call_operand.vmem [shape: f32[4,16,256], index: 3, kind: input, shape index: {}]
  %s4 = inlined_call_operand.vmem [shape: f32[4,4,16], index: 4, kind: input, shape index: {}]
  %s5 = inlined_call_operand.vmem [shape: f32[4,2,256], index: 5, kind: input, shape index: {}]
  %s6 = inlined_call_operand.hbm [shape: f32[8,256], index: 6, kind: output, shape index: {}]
  %s7 = sld [smem:[#allocation0]]
  $region34: #{transformation.1} parent=0
    _
  %s9 = ssub.s32 1, %s7
  %s10 = scalar_select 0, %s9, %s7
  $region1: #{transformation.1} parent=0
    #allocation2 [shape = 'u8[8192]{0}', space=vmem, size = 0x2000, scoped, tag = 'output window, operand 0, single buffered']
    #allocation3 [shape = 's32[1]{0}', space=sflag, size = 0x4, scoped, tag = 'scoped memory for transformation.1']
    %11 = vsyncpa [#allocation3], 0
    // Predicated region
    $region2: #{transformation.1} parent=1 // pred_check
      _
    $region3: #{transformation.1} parent=1 // pred_check_branch
      %13 = sbr.rel (0) target = $region5
    $region4: #{transformation.1} parent=1 // pred_region
      _
    $region5: #{transformation.1} parent=1 // pred_fallthru
      _
    // Predicated region
    $region6: #{transformation.1} parent=1 // pred_check
      _
    $region7: #{transformation.1} parent=1 // pred_check_branch
      %15 = sbr.rel (0) target = $region9
    $region8: #{transformation.1} parent=1 // pred_region
      _
    $region9: #{transformation.1} parent=1 // pred_fallthru
      _
    // Predicated region
    $region10: #{transformation.1} parent=1 // pred_check
      _
    $region11: #{transformation.1} parent=1 // pred_check_branch
      %17 = sbr.rel (0) target = $region13
    $region12: #{transformation.1} parent=1 // pred_region
      _
    $region13: #{transformation.1} parent=1 // pred_fallthru
      _
    // Predicated region
    $region14: #{transformation.1} parent=1 // pred_check
      _
    $region15: #{transformation.1} parent=1 // pred_check_branch
      %19 = sbr.rel (0) target = $region17
    $region16: #{transformation.1} parent=1 // pred_region
      _
    $region17: #{transformation.1} parent=1 // pred_fallthru
      _
    // Predicated region
    $region18: #{transformation.1} parent=1 // pred_check
      _
    $region19: #{transformation.1} parent=1 // pred_check_branch
      %21 = sbr.rel (0) target = $region21
    $region20: #{transformation.1} parent=1 // pred_region
      _
    $region21: #{transformation.1} parent=1 // pred_fallthru
      _
    // Predicated region
    $region22: #{transformation.1} parent=1 // pred_check
      _
    $region23: #{transformation.1} parent=1 // pred_check_branch
      %23 = sbr.rel (0) target = $region25
    $region24: #{transformation.1} parent=1 // pred_region
      _
    $region25: #{transformation.1} parent=1 // pred_fallthru
      _
    %v24 = vld [vmem:[%s0] sm:$0xff]
    %v25 = vld [vmem:[%s0 + $0x8] sm:$0xff]
    %v26 = vld [vmem:[%s4] sm:$0xf]
    %v27 = vld [vmem:[%s5] sm:$0xf]
    %v28 = vld [vmem:[%s1] sm:$0xff]
    %v29 = vld [vmem:[%s1 + $0x8] sm:$0xff]
    %v30 = vld [vmem:[%s1 + $0x10] sm:$0xff]
    %v31 = vld [vmem:[%s1 + $0x18] sm:$0xff]
    %v32 = vld [vmem:[%s1 + $0x20] sm:$0xff]
    %v33 = vld [vmem:[%s1 + $0x28] sm:$0xff]
    %v34 = vld [vmem:[%s1 + $0x30] sm:$0xff]
    %v35 = vld [vmem:[%s1 + $0x38] sm:$0xff]
    %v36 = vld [vmem:[%s1 + $0x40] sm:$0xff]
    %v37 = vld [vmem:[%s1 + $0x48] sm:$0xff]
    %v38 = vld [vmem:[%s1 + $0x50] sm:$0xff]
    %v39 = vld [vmem:[%s1 + $0x58] sm:$0xff]
    %v40 = vld [vmem:[%s1 + $0x60] sm:$0xff]
    %v41 = vld [vmem:[%s1 + $0x68] sm:$0xff]
    %v42 = vld [vmem:[%s1 + $0x70] sm:$0xff]
    %v43 = vld [vmem:[%s1 + $0x78] sm:$0xff]
    %v44 = vld [vmem:[%s1 + $0x80] sm:$0xff]
    %v45 = vld [vmem:[%s1 + $0x88] sm:$0xff]
    %v46 = vld [vmem:[%s1 + $0x90] sm:$0xff]
    %v47 = vld [vmem:[%s1 + $0x98] sm:$0xff]
    %v48 = vld [vmem:[%s1 + $0xa0] sm:$0xff]
    %v49 = vld [vmem:[%s1 + $0xa8] sm:$0xff]
    %v50 = vld [vmem:[%s1 + $0xb0] sm:$0xff]
    %v51 = vld [vmem:[%s1 + $0xb8] sm:$0xff]
    %v52 = vld [vmem:[%s1 + $0xc0] sm:$0xff]
    %v53 = vld [vmem:[%s1 + $0xc8] sm:$0xff]
    %v54 = vld [vmem:[%s1 + $0xd0] sm:$0xff]
    %v55 = vld [vmem:[%s1 + $0xd8] sm:$0xff]
    %v56 = vld [vmem:[%s1 + $0xe0] sm:$0xff]
    %v57 = vld [vmem:[%s1 + $0xe8] sm:$0xff]
    %v58 = vld [vmem:[%s1 + $0xf0] sm:$0xff]
    %v59 = vld [vmem:[%s1 + $0xf8] sm:$0xff]
    %60 = vmatprep.subr.mxu0 0.0
    %61 = vmatpush1.msra.mxu0 %v28
    %62 = vmatprep.subr.mxu0 0.0
    %63 = vmatpush1.msra.mxu0 %v29
    %64 = vmatprep.subr.mxu0 0.0
    %65 = vmatpush1.msra.mxu0 %v30
    %66 = vmatprep.subr.mxu0 0.0
    %67 = vmatpush1.msra.mxu0 %v31
    %68 = vmatprep.subr.mxu0 0.0
    %69 = vmatpush1.msra.mxu0 %v32
    %70 = vmatprep.subr.mxu0 0.0
    %71 = vmatpush1.msra.mxu0 %v33
    %72 = vmatprep.subr.mxu0 0.0
    %73 = vmatpush1.msra.mxu0 %v34
    %74 = vmatprep.subr.mxu0 0.0
    %75 = vmatpush1.msra.mxu0 %v35
    %76 = vmatprep.subr.mxu0 0.0
    %77 = vmatpush1.msra.mxu0 %v36
    %78 = vmatprep.subr.mxu0 0.0
    %79 = vmatpush1.msra.mxu0 %v37
    %80 = vmatprep.subr.mxu0 0.0
    %81 = vmatpush1.msra.mxu0 %v38
    %82 = vmatprep.subr.mxu0 0.0
    %83 = vmatpush1.msra.mxu0 %v39
    %84 = vmatprep.subr.mxu0 0.0
    %85 = vmatpush1.msra.mxu0 %v40
    %86 = vmatprep.subr.mxu0 0.0
    %87 = vmatpush1.msra.mxu0 %v41
    %88 = vmatprep.subr.mxu0 0.0
    %89 = vmatpush1.msra.mxu0 %v42
    %90 = vmatprep.subr.mxu0 0.0
    %91 = vmatpush1.msra.mxu0 %v43
    %92 = vmatprep.subr.mxu0 0.0
    %93 = vmatpush1.msra.mxu0 %v44
    %94 = vmatprep.subr.mxu0 0.0
    %95 = vmatpush1.msra.mxu0 %v45
    %96 = vmatprep.subr.mxu0 0.0
    %97 = vmatpush1.msra.mxu0 %v46
    %98 = vmatprep.subr.mxu0 0.0
    %99 = vmatpush1.msra.mxu0 %v47
    %100 = vmatprep.subr.mxu0 0.0
    %101 = vmatpush1.msra.mxu0 %v48
    %102 = vmatprep.subr.mxu0 0.0
    %103 = vmatpush1.msra.mxu0 %v49
    %104 = vmatprep.subr.mxu0 0.0
    %105 = vmatpush1.msra.mxu0 %v50
    %106 = vmatprep.subr.mxu0 0.0
    %107 = vmatpush1.msra.mxu0 %v51
    %108 = vmatprep.subr.mxu0 0.0
    %109 = vmatpush1.msra.mxu0 %v52
    %110 = vmatprep.subr.mxu0 0.0
    %111 = vmatpush1.msra.mxu0 %v53
    %112 = vmatprep.subr.mxu0 0.0
    %113 = vmatpush1.msra.mxu0 %v54
    %114 = vmatprep.subr.mxu0 0.0
    %115 = vmatpush1.msra.mxu0 %v55
    %116 = vmatprep.subr.mxu0 0.0
    %117 = vmatpush1.msra.mxu0 %v56
    %118 = vmatprep.subr.mxu0 0.0
    %119 = vmatpush1.msra.mxu0 %v57
    %120 = vmatprep.subr.mxu0 0.0
    %121 = vmatpush1.msra.mxu0 %v58
    %122 = vmatprep.subr.mxu0 0.0
    %123 = vmatpush1.msra.mxu0 %v59
    %124 = vmatprep.mubr.f32.mxu0 %v25
    %125 = vmatmul.mubr.f32.gmra.mrb[0].mxu0 %v24
    %v126 = vpop.f32.mrb[0].mxu0
    %v127 = vadd.f32 0.0, %v126
    %v128 = vpop.f32.mrb[0].mxu0
    %129 = vdwg.mxu0
    %vm130 = vcmask 130048
    %v131 = vsel %vm130, %v127, 0.0
    %v132 = vrot.slane %v131, 4
    %v133 = vadd.f32 %v131, %v132
    %v134 = vrot.slane %v133, 2
    %v135 = vadd.f32 %v133, %v134
    %v136 = vrot.slane %v135, 1
    %v137 = vadd.f32 %v135, %v136
    %v138 = vmul.f32 %v137, 0.125
    %v139 = vmul.f32 %v127, %v127
    %v140 = vsel %vm130, %v139, 0.0
    %v141 = vrot.slane %v140, 4
    %v142 = vadd.f32 %v140, %v141
    %v143 = vrot.slane %v142, 2
    %v144 = vadd.f32 %v142, %v143
    %v145 = vrot.slane %v144, 1
    %v146 = vadd.f32 %v144, %v145
    %v147 = vmul.f32 %v146, 0.125
    %v148 = vmul.f32 %v138, %v138
    %v149 = vsub.f32 %v147, %v148
    %v150 = vmax.f32 %v149, 0.0
    %v151 = vadd.f32 %v150, 1e-05
    %v152 = vrsqrt.pop %v151
    %v153 = vmul.f32 %v26, %v152
    %v154 = vmul.f32 %v138, %v153
    %v156 = vrot.slane %v154, 7
    %v158 = vsub.f32 %v26, %v156
    %v159 = vlaneseq
    %v160 = vshrl.u32 %v159, 7
    %v161 = vsub.s32 0, %v160
    %v162 = vrot.slane %v153, %v161
    %v163 = vmul.f32 %v127, %v162
    %v164 = vlaneseq
    %v165 = vshrl.u32 %v164, 7
    %v166 = vsub.s32 1, %v165
    %v167 = vrot.slane %v158, %v166
    %v168 = vadd.f32 %v163, %v167
    %v169 = vmax.f32 %v168, 0.0
    %v170 = vld [vmem:[%s2] sm:$0xff]
    %v171 = vld [vmem:[%s2 + $0x8] sm:$0xff]
    %v173 = vsel %vm130, %v169, 0
    %175 = vmatprep.subr.mxu0 0.0
    %176 = vmatpush1.msra.mxu0 %v170
    %177 = vmatprep.subr.mxu0 0.0
    %178 = vmatpush1.msra.mxu0 %v171
    %179 = vmatprep.subr.mxu0 0.0
    %180 = vmatpush1.msra.mxu0 0.0
    %181 = vmatprep.subr.mxu0 0.0
    %182 = vmatpush1.msra.mxu0 0.0
    %183 = vmatprep.subr.mxu0 0.0
    %184 = vmatpush1.msra.mxu0 0.0
    %185 = vmatprep.subr.mxu0 0.0
    %186 = vmatpush1.msra.mxu0 0.0
    %187 = vmatprep.subr.mxu0 0.0
    %188 = vmatpush1.msra.mxu0 0.0
    %189 = vmatprep.subr.mxu0 0.0
    %190 = vmatpush1.msra.mxu0 0.0
    %191 = vmatprep.subr.mxu0 0.0
    %192 = vmatpush1.msra.mxu0 0.0
    %193 = vmatprep.subr.mxu0 0.0
    %194 = vmatpush1.msra.mxu0 0.0
    %195 = vmatprep.subr.mxu0 0.0
    %196 = vmatpush1.msra.mxu0 0.0
    %197 = vmatprep.subr.mxu0 0.0
    %198 = vmatpush1.msra.mxu0 0.0
    %199 = vmatprep.subr.mxu0 0.0
    %200 = vmatpush1.msra.mxu0 0.0
    %201 = vmatprep.subr.mxu0 0.0
    %202 = vmatpush1.msra.mxu0 0.0
    %203 = vmatprep.subr.mxu0 0.0
    %204 = vmatpush1.msra.mxu0 0.0
    %205 = vmatprep.subr.mxu0 0.0
    %206 = vmatpush1.msra.mxu0 0.0
    %207 = vmatprep.subr.mxu0 0.0
    %208 = vmatpush1.msra.mxu0 0.0
    %209 = vmatprep.subr.mxu0 0.0
    %210 = vmatpush1.msra.mxu0 0.0
    %211 = vmatprep.subr.mxu0 0.0
    %212 = vmatpush1.msra.mxu0 0.0
    %213 = vmatprep.subr.mxu0 0.0
    %214 = vmatpush1.msra.mxu0 0.0
    %215 = vmatprep.subr.mxu0 0.0
    %216 = vmatpush1.msra.mxu0 0.0
    %217 = vmatprep.subr.mxu0 0.0
    %218 = vmatpush1.msra.mxu0 0.0
    %219 = vmatprep.subr.mxu0 0.0
    %220 = vmatpush1.msra.mxu0 0.0
    %221 = vmatprep.subr.mxu0 0.0
    %222 = vmatpush1.msra.mxu0 0.0
    %223 = vmatprep.subr.mxu0 0.0
    %224 = vmatpush1.msra.mxu0 0.0
    %225 = vmatprep.subr.mxu0 0.0
    %226 = vmatpush1.msra.mxu0 0.0
    %227 = vmatprep.subr.mxu0 0.0
    %228 = vmatpush1.msra.mxu0 0.0
    %229 = vmatprep.subr.mxu0 0.0
    %230 = vmatpush1.msra.mxu0 0.0
    %231 = vmatprep.subr.mxu0 0.0
    %232 = vmatpush1.msra.mxu0 0.0
    %233 = vmatprep.subr.mxu0 0.0
    %234 = vmatpush1.msra.mxu0 0.0
    %235 = vmatprep.subr.mxu0 0.0
    %236 = vmatpush1.msra.mxu0 0.0
    %237 = vmatprep.subr.mxu0 0.0
    %238 = vmatpush1.msra.mxu0 0.0
    %239 = vmatprep.mubr.f32.mxu0 0.0
    %240 = vmatmul.mubr.f32.gmra.mrb[0].mxu0 %v173
    %v241 = vpop.f32.mrb[0].mxu0
    %v242 = vadd.f32 0.0, %v241
    %v243 = vpop.f32.mrb[0].mxu0
    %244 = vdwg.mxu0
    %v245 = vsel %vm130, %v242, 0.0
    %v246 = vrot.slane %v245, 4
    %v247 = vadd.f32 %v245, %v246
    %v248 = vrot.slane %v247, 2
    %v249 = vadd.f32 %v247, %v248
    %v250 = vrot.slane %v249, 1
    %v251 = vadd.f32 %v249, %v250
    %v252 = vmul.f32 %v251, 0.125
    %v253 = vmul.f32 %v242, %v242
    %v254 = vsel %vm130, %v253, 0.0
    %v255 = vrot.slane %v254, 4
    %v256 = vadd.f32 %v254, %v255
    %v257 = vrot.slane %v256, 2
    %v258 = vadd.f32 %v256, %v257
    %v259 = vrot.slane %v258, 1
    %v260 = vadd.f32 %v258, %v259
    %v261 = vmul.f32 %v260, 0.125
    %v262 = vmul.f32 %v252, %v252
    %v263 = vsub.f32 %v261, %v262
    %v264 = vmax.f32 %v263, 0.0
    %v265 = vadd.f32 %v264, 1e-05
    %v266 = vrsqrt.pop %v265
    %v267 = vmul.f32 %v26, %v266
    %v268 = vmul.f32 %v252, %v267
    %v270 = vrot.slane %v268, 7
    %v272 = vsub.f32 %v26, %v270
    %v273 = vlaneseq
    %v274 = vshrl.u32 %v273, 7
    %v275 = vsub.s32 2, %v274
    %v276 = vrot.slane %v267, %v275
    %v277 = vmul.f32 %v242, %v276
    %v278 = vlaneseq
    %v279 = vshrl.u32 %v278, 7
    %v280 = vsub.s32 3, %v279
    %v281 = vrot.slane %v272, %v280
    %v282 = vadd.f32 %v277, %v281
    %v283 = vmax.f32 %v282, 0.0
    %v284 = vld [vmem:[%s3] sm:$0xff]
    %v285 = vld [vmem:[%s3 + $0x8] sm:$0xff]
    %v286 = vld [vmem:[%s3 + $0x10] sm:$0xff]
    %v287 = vld [vmem:[%s3 + $0x18] sm:$0xff]
    %v289 = vsel %vm130, %v283, 0
    %291 = vmatprep.subr.mxu0 %v285
    %292 = vmatpush1.msra.mxu0 %v284
    %293 = vmatprep.subr.mxu0 %v287
    %294 = vmatpush1.msra.mxu0 %v286
    %295 = vmatprep.subr.mxu0 0.0
    %296 = vmatpush1.msra.mxu0 0.0
    %297 = vmatprep.subr.mxu0 0.0
    %298 = vmatpush1.msra.mxu0 0.0
    %299 = vmatprep.subr.mxu0 0.0
    %300 = vmatpush1.msra.mxu0 0.0
    %301 = vmatprep.subr.mxu0 0.0
    %302 = vmatpush1.msra.mxu0 0.0
    %303 = vmatprep.subr.mxu0 0.0
    %304 = vmatpush1.msra.mxu0 0.0
    %305 = vmatprep.subr.mxu0 0.0
    %306 = vmatpush1.msra.mxu0 0.0
    %307 = vmatprep.subr.mxu0 0.0
    %308 = vmatpush1.msra.mxu0 0.0
    %309 = vmatprep.subr.mxu0 0.0
    %310 = vmatpush1.msra.mxu0 0.0
    %311 = vmatprep.subr.mxu0 0.0
    %312 = vmatpush1.msra.mxu0 0.0
    %313 = vmatprep.subr.mxu0 0.0
    %314 = vmatpush1.msra.mxu0 0.0
    %315 = vmatprep.subr.mxu0 0.0
    %316 = vmatpush1.msra.mxu0 0.0
    %317 = vmatprep.subr.mxu0 0.0
    %318 = vmatpush1.msra.mxu0 0.0
    %319 = vmatprep.subr.mxu0 0.0
    %320 = vmatpush1.msra.mxu0 0.0
    %321 = vmatprep.subr.mxu0 0.0
    %322 = vmatpush1.msra.mxu0 0.0
    %323 = vmatprep.subr.mxu0 0.0
    %324 = vmatpush1.msra.mxu0 0.0
    %325 = vmatprep.subr.mxu0 0.0
    %326 = vmatpush1.msra.mxu0 0.0
    %327 = vmatprep.subr.mxu0 0.0
    %328 = vmatpush1.msra.mxu0 0.0
    %329 = vmatprep.subr.mxu0 0.0
    %330 = vmatpush1.msra.mxu0 0.0
    %331 = vmatprep.subr.mxu0 0.0
    %332 = vmatpush1.msra.mxu0 0.0
    %333 = vmatprep.subr.mxu0 0.0
    %334 = vmatpush1.msra.mxu0 0.0
    %335 = vmatprep.subr.mxu0 0.0
    %336 = vmatpush1.msra.mxu0 0.0
    %337 = vmatprep.subr.mxu0 0.0
    %338 = vmatpush1.msra.mxu0 0.0
    %339 = vmatprep.subr.mxu0 0.0
    %340 = vmatpush1.msra.mxu0 0.0
    %341 = vmatprep.subr.mxu0 0.0
    %342 = vmatpush1.msra.mxu0 0.0
    %343 = vmatprep.subr.mxu0 0.0
    %344 = vmatpush1.msra.mxu0 0.0
    %345 = vmatprep.subr.mxu0 0.0
    %346 = vmatpush1.msra.mxu0 0.0
    %347 = vmatprep.subr.mxu0 0.0
    %348 = vmatpush1.msra.mxu0 0.0
    %349 = vmatprep.subr.mxu0 0.0
    %350 = vmatpush1.msra.mxu0 0.0
    %351 = vmatprep.subr.mxu0 0.0
    %352 = vmatpush1.msra.mxu0 0.0
    %353 = vmatprep.subr.mxu0 0.0
    %354 = vmatpush1.msra.mxu0 0.0
    %355 = vmatprep.mubr.f32.mxu0 0.0
    %356 = vmatmul.mubr.f32.gmra.mrb[0].mxu0 %v289
    %v357 = vpop.f32.mrb[0].mxu0
    %v358 = vadd.f32 0.0, %v357
    %v359 = vpop.f32.mrb[0].mxu0
    %v360 = vadd.f32 0.0, %v359
    %361 = vdwg.mxu0
    %v362 = vrot.slane %v358, 4
    %v363 = vadd.f32 %v358, %v362
    %v364 = vrot.slane %v363, 2
    %v365 = vadd.f32 %v363, %v364
    %v366 = vrot.slane %v365, 1
    %v367 = vadd.f32 %v365, %v366
    %v368 = vrot.slane %v360, 4
    %v369 = vadd.f32 %v360, %v368
    %v370 = vrot.slane %v369, 2
    %v371 = vadd.f32 %v369, %v370
    %v372 = vrot.slane %v371, 1
    %v373 = vadd.f32 %v371, %v372
    %v374 = vmul.f32 %v367, 0.125
    %v375 = vmul.f32 %v373, 0.125
    %v376 = vmul.f32 %v358, %v358
    %v377 = vmul.f32 %v360, %v360
    %v378 = vrot.slane %v376, 4
    %v379 = vadd.f32 %v376, %v378
    %v380 = vrot.slane %v379, 2
    %v381 = vadd.f32 %v379, %v380
    %v382 = vrot.slane %v381, 1
    %v383 = vadd.f32 %v381, %v382
    %v384 = vrot.slane %v377, 4
    %v385 = vadd.f32 %v377, %v384
    %v386 = vrot.slane %v385, 2
    %v387 = vadd.f32 %v385, %v386
    %v388 = vrot.slane %v387, 1
    %v389 = vadd.f32 %v387, %v388
    %v390 = vmul.f32 %v383, 0.125
    %v391 = vmul.f32 %v389, 0.125
    %v392 = vmul.f32 %v374, %v374
    %v393 = vmul.f32 %v375, %v375
    %v394 = vsub.f32 %v390, %v392
    %v395 = vsub.f32 %v391, %v393
    %v396 = vmax.f32 %v394, 0.0
    %v397 = vmax.f32 %v395, 0.0
    %v398 = vadd.f32 %v396, 1e-05
    %v399 = vadd.f32 %v397, 1e-05
    %v400 = vrsqrt.pop %v398
    %v401 = vrsqrt.pop %v399
    %v404 = vcombine.low %v400, %v401
    %v406 = vunpack.c.l.s4 1983009808
    %v407 = vunpack.c.0.s8 %v406
    %v408 = vlaneseq
    %v409 = vshrl.u32 %v408, 7
    %v410 = vsub.s32 %v407, %v409
    %v411 = vrot.slane %v404, %v410
    %v413 = vmul.f32 %v27, %v411
    %v415 = vlaneseq
    %v416 = vshrl.u32 %v415, 7
    %v417 = vsub.s32 0, %v416
    %v418 = vrot.slane %v413, %v417
    %v419 = vlaneseq
    %v420 = vshrl.u32 %v419, 7
    %v421 = vsub.s32 2, %v420
    %v422 = vrot.slane %v413, %v421
    %v425 = vmul.f32 %v374, %v418
    %v426 = vmul.f32 %v375, %v422
    %v429 = vcombine.low %v425, %v426
    %v431 = vunpack.c.l.s4 1983009808
    %v432 = vunpack.c.0.s8 %v431
    %v433 = vlaneseq
    %v434 = vshrl.u32 %v433, 7
    %v435 = vsub.s32 %v432, %v434
    %v436 = vrot.slane %v429, %v435
    %v437 = vrot.slane %v436, 7
    %v439 = vsub.f32 %v27, %v437
    %v440 = vlaneseq
    %v441 = vshrl.u32 %v440, 7
    %v442 = vsub.s32 0, %v441
    %v443 = vrot.slane %v418, %v442
    %v444 = vlaneseq
    %v445 = vshrl.u32 %v444, 7
    %v446 = vsub.s32 0, %v445
    %v447 = vrot.slane %v422, %v446
    %v448 = vmul.f32 %v358, %v443
    %v449 = vmul.f32 %v360, %v447
    %v451 = vlaneseq
    %v452 = vshrl.u32 %v451, 7
    %v453 = vsub.s32 1, %v452
    %v454 = vrot.slane %v439, %v453
    %v455 = vlaneseq
    %v456 = vshrl.u32 %v455, 7
    %v457 = vsub.s32 3, %v456
    %v458 = vrot.slane %v439, %v457
    %v461 = vlaneseq
    %v462 = vshrl.u32 %v461, 7
    %v463 = vsub.s32 1, %v462
    %v464 = vrot.slane %v454, %v463
    %v465 = vlaneseq
    %v466 = vshrl.u32 %v465, 7
    %v467 = vsub.s32 1, %v466
    %v468 = vrot.slane %v458, %v467
    %v469 = vadd.f32 %v448, %v464
    %v470 = vadd.f32 %v449, %v468
    %v471 = vmax.f32 %v469, 0.0
    %v472 = vmax.f32 %v470, 0.0
    %v473 = vadd.f32 %v471, %v24
    %v474 = vadd.f32 %v472, %v25
    %s475 = scalar_lea.vmem %s4, 4
    %v476 = vld [vmem:[%s475] sm:$0xf]
    %s477 = scalar_lea.vmem %s5, 4
    %v478 = vld [vmem:[%s477] sm:$0xf]
    %s479 = scalar_lea.vmem %s1, 256
    %v480 = vld [vmem:[%s479] sm:$0xff]
    %v481 = vld [vmem:[%s479 + $0x8] sm:$0xff]
    %v482 = vld [vmem:[%s479 + $0x10] sm:$0xff]
    %v483 = vld [vmem:[%s479 + $0x18] sm:$0xff]
    %v484 = vld [vmem:[%s479 + $0x20] sm:$0xff]
    %v485 = vld [vmem:[%s479 + $0x28] sm:$0xff]
    %v486 = vld [vmem:[%s479 + $0x30] sm:$0xff]
    %v487 = vld [vmem:[%s479 + $0x38] sm:$0xff]
    %v488 = vld [vmem:[%s479 + $0x40] sm:$0xff]
    %v489 = vld [vmem:[%s479 + $0x48] sm:$0xff]
    %v490 = vld [vmem:[%s479 + $0x50] sm:$0xff]
    %v491 = vld [vmem:[%s479 + $0x58] sm:$0xff]
    %v492 = vld [vmem:[%s479 + $0x60] sm:$0xff]
    %v493 = vld [vmem:[%s479 + $0x68] sm:$0xff]
    %v494 = vld [vmem:[%s479 + $0x70] sm:$0xff]
    %v495 = vld [vmem:[%s479 + $0x78] sm:$0xff]
    %v496 = vld [vmem:[%s479 + $0x80] sm:$0xff]
    %v497 = vld [vmem:[%s479 + $0x88] sm:$0xff]
    %v498 = vld [vmem:[%s479 + $0x90] sm:$0xff]
    %v499 = vld [vmem:[%s479 + $0x98] sm:$0xff]
    %v500 = vld [vmem:[%s479 + $0xa0] sm:$0xff]
    %v501 = vld [vmem:[%s479 + $0xa8] sm:$0xff]
    %v502 = vld [vmem:[%s479 + $0xb0] sm:$0xff]
    %v503 = vld [vmem:[%s479 + $0xb8] sm:$0xff]
    %v504 = vld [vmem:[%s479 + $0xc0] sm:$0xff]
    %v505 = vld [vmem:[%s479 + $0xc8] sm:$0xff]
    %v506 = vld [vmem:[%s479 + $0xd0] sm:$0xff]
    %v507 = vld [vmem:[%s479 + $0xd8] sm:$0xff]
    %v508 = vld [vmem:[%s479 + $0xe0] sm:$0xff]
    %v509 = vld [vmem:[%s479 + $0xe8] sm:$0xff]
    %v510 = vld [vmem:[%s479 + $0xf0] sm:$0xff]
    %v511 = vld [vmem:[%s479 + $0xf8] sm:$0xff]
    %512 = vmatprep.subr.mxu0 0.0
    %513 = vmatpush1.msra.mxu0 %v480
    %514 = vmatprep.subr.mxu0 0.0
    %515 = vmatpush1.msra.mxu0 %v481
    %516 = vmatprep.subr.mxu0 0.0
    %517 = vmatpush1.msra.mxu0 %v482
    %518 = vmatprep.subr.mxu0 0.0
    %519 = vmatpush1.msra.mxu0 %v483
    %520 = vmatprep.subr.mxu0 0.0
    %521 = vmatpush1.msra.mxu0 %v484
    %522 = vmatprep.subr.mxu0 0.0
    %523 = vmatpush1.msra.mxu0 %v485
    %524 = vmatprep.subr.mxu0 0.0
    %525 = vmatpush1.msra.mxu0 %v486
    %526 = vmatprep.subr.mxu0 0.0
    %527 = vmatpush1.msra.mxu0 %v487
    %528 = vmatprep.subr.mxu0 0.0
    %529 = vmatpush1.msra.mxu0 %v488
    %530 = vmatprep.subr.mxu0 0.0
    %531 = vmatpush1.msra.mxu0 %v489
    %532 = vmatprep.subr.mxu0 0.0
    %533 = vmatpush1.msra.mxu0 %v490
    %534 = vmatprep.subr.mxu0 0.0
    %535 = vmatpush1.msra.mxu0 %v491
    %536 = vmatprep.subr.mxu0 0.0
    %537 = vmatpush1.msra.mxu0 %v492
    %538 = vmatprep.subr.mxu0 0.0
    %539 = vmatpush1.msra.mxu0 %v493
    %540 = vmatprep.subr.mxu0 0.0
    %541 = vmatpush1.msra.mxu0 %v494
    %542 = vmatprep.subr.mxu0 0.0
    %543 = vmatpush1.msra.mxu0 %v495
    %544 = vmatprep.subr.mxu0 0.0
    %545 = vmatpush1.msra.mxu0 %v496
    %546 = vmatprep.subr.mxu0 0.0
    %547 = vmatpush1.msra.mxu0 %v497
    %548 = vmatprep.subr.mxu0 0.0
    %549 = vmatpush1.msra.mxu0 %v498
    %550 = vmatprep.subr.mxu0 0.0
    %551 = vmatpush1.msra.mxu0 %v499
    %552 = vmatprep.subr.mxu0 0.0
    %553 = vmatpush1.msra.mxu0 %v500
    %554 = vmatprep.subr.mxu0 0.0
    %555 = vmatpush1.msra.mxu0 %v501
    %556 = vmatprep.subr.mxu0 0.0
    %557 = vmatpush1.msra.mxu0 %v502
    %558 = vmatprep.subr.mxu0 0.0
    %559 = vmatpush1.msra.mxu0 %v503
    %560 = vmatprep.subr.mxu0 0.0
    %561 = vmatpush1.msra.mxu0 %v504
    %562 = vmatprep.subr.mxu0 0.0
    %563 = vmatpush1.msra.mxu0 %v505
    %564 = vmatprep.subr.mxu0 0.0
    %565 = vmatpush1.msra.mxu0 %v506
    %566 = vmatprep.subr.mxu0 0.0
    %567 = vmatpush1.msra.mxu0 %v507
    %568 = vmatprep.subr.mxu0 0.0
    %569 = vmatpush1.msra.mxu0 %v508
    %570 = vmatprep.subr.mxu0 0.0
    %571 = vmatpush1.msra.mxu0 %v509
    %572 = vmatprep.subr.mxu0 0.0
    %573 = vmatpush1.msra.mxu0 %v510
    %574 = vmatprep.subr.mxu0 0.0
    %575 = vmatpush1.msra.mxu0 %v511
    %576 = vmatprep.mubr.f32.mxu0 %v474
    %577 = vmatmul.mubr.f32.gmra.mrb[0].mxu0 %v473
    %v578 = vpop.f32.mrb[0].mxu0
    %v579 = vadd.f32 0.0, %v578
    %v580 = vpop.f32.mrb[0].mxu0
    %581 = vdwg.mxu0
    %v582 = vsel %vm130, %v579, 0.0
    %v583 = vrot.slane %v582, 4
    %v584 = vadd.f32 %v582, %v583
    %v585 = vrot.slane %v584, 2
    %v586 = vadd.f32 %v584, %v585
    %v587 = vrot.slane %v586, 1
    %v588 = vadd.f32 %v586, %v587
    %v589 = vmul.f32 %v588, 0.125
    %v590 = vmul.f32 %v579, %v579
    %v591 = vsel %vm130, %v590, 0.0
    %v592 = vrot.slane %v591, 4
    %v593 = vadd.f32 %v591, %v592
    %v594 = vrot.slane %v593, 2
    %v595 = vadd.f32 %v593, %v594
    %v596 = vrot.slane %v595, 1
    %v597 = vadd.f32 %v595, %v596
    %v598 = vmul.f32 %v597, 0.125
    %v599 = vmul.f32 %v589, %v589
    %v600 = vsub.f32 %v598, %v599
    %v601 = vmax.f32 %v600, 0.0
    %v602 = vadd.f32 %v601, 1e-05
    %v603 = vrsqrt.pop %v602
    %v604 = vmul.f32 %v476, %v603
    %v605 = vmul.f32 %v589, %v604
    %v607 = vrot.slane %v605, 7
    %v609 = vsub.f32 %v476, %v607
    %v610 = vlaneseq
    %v611 = vshrl.u32 %v610, 7
    %v612 = vsub.s32 0, %v611
    %v613 = vrot.slane %v604, %v612
    %v614 = vmul.f32 %v579, %v613
    %v615 = vlaneseq
    %v616 = vshrl.u32 %v615, 7
    %v617 = vsub.s32 1, %v616
    %v618 = vrot.slane %v609, %v617
    %v619 = vadd.f32 %v614, %v618
    %v620 = vmax.f32 %v619, 0.0
    %s621 = scalar_lea.vmem %s2, 16
    %v622 = vld [vmem:[%s621] sm:$0xff]
    %v623 = vld [vmem:[%s621 + $0x8] sm:$0xff]
    %v625 = vsel %vm130, %v620, 0
    %627 = vmatprep.subr.mxu0 0.0
    %628 = vmatpush1.msra.mxu0 %v622
    %629 = vmatprep.subr.mxu0 0.0
    %630 = vmatpush1.msra.mxu0 %v623
    %631 = vmatprep.subr.mxu0 0.0
    %632 = vmatpush1.msra.mxu0 0.0
    %633 = vmatprep.subr.mxu0 0.0
    %634 = vmatpush1.msra.mxu0 0.0
    %635 = vmatprep.subr.mxu0 0.0
    %636 = vmatpush1.msra.mxu0 0.0
    %637 = vmatprep.subr.mxu0 0.0
    %638 = vmatpush1.msra.mxu0 0.0
    %639 = vmatprep.subr.mxu0 0.0
    %640 = vmatpush1.msra.mxu0 0.0
    %641 = vmatprep.subr.mxu0 0.0
    %642 = vmatpush1.msra.mxu0 0.0
    %643 = vmatprep.subr.mxu0 0.0
    %644 = vmatpush1.msra.mxu0 0.0
    %645 = vmatprep.subr.mxu0 0.0
    %646 = vmatpush1.msra.mxu0 0.0
    %647 = vmatprep.subr.mxu0 0.0
    %648 = vmatpush1.msra.mxu0 0.0
    %649 = vmatprep.subr.mxu0 0.0
    %650 = vmatpush1.msra.mxu0 0.0
    %651 = vmatprep.subr.mxu0 0.0
    %652 = vmatpush1.msra.mxu0 0.0
    %653 = vmatprep.subr.mxu0 0.0
    %654 = vmatpush1.msra.mxu0 0.0
    %655 = vmatprep.subr.mxu0 0.0
    %656 = vmatpush1.msra.mxu0 0.0
    %657 = vmatprep.subr.mxu0 0.0
    %658 = vmatpush1.msra.mxu0 0.0
    %659 = vmatprep.subr.mxu0 0.0
    %660 = vmatpush1.msra.mxu0 0.0
    %661 = vmatprep.subr.mxu0 0.0
    %662 = vmatpush1.msra.mxu0 0.0
    %663 = vmatprep.subr.mxu0 0.0
    %664 = vmatpush1.msra.mxu0 0.0
    %665 = vmatprep.subr.mxu0 0.0
    %666 = vmatpush1.msra.mxu0 0.0
    %667 = vmatprep.subr.mxu0 0.0
    %668 = vmatpush1.msra.mxu0 0.0
    %669 = vmatprep.subr.mxu0 0.0
    %670 = vmatpush1.msra.mxu0 0.0
    %671 = vmatprep.subr.mxu0 0.0
    %672 = vmatpush1.msra.mxu0 0.0
    %673 = vmatprep.subr.mxu0 0.0
    %674 = vmatpush1.msra.mxu0 0.0
    %675 = vmatprep.subr.mxu0 0.0
    %676 = vmatpush1.msra.mxu0 0.0
    %677 = vmatprep.subr.mxu0 0.0
    %678 = vmatpush1.msra.mxu0 0.0
    %679 = vmatprep.subr.mxu0 0.0
    %680 = vmatpush1.msra.mxu0 0.0
    %681 = vmatprep.subr.mxu0 0.0
    %682 = vmatpush1.msra.mxu0 0.0
    %683 = vmatprep.subr.mxu0 0.0
    %684 = vmatpush1.msra.mxu0 0.0
    %685 = vmatprep.subr.mxu0 0.0
    %686 = vmatpush1.msra.mxu0 0.0
    %687 = vmatprep.subr.mxu0 0.0
    %688 = vmatpush1.msra.mxu0 0.0
    %689 = vmatprep.subr.mxu0 0.0
    %690 = vmatpush1.msra.mxu0 0.0
    %691 = vmatprep.mubr.f32.mxu0 0.0
    %692 = vmatmul.mubr.f32.gmra.mrb[0].mxu0 %v625
    %v693 = vpop.f32.mrb[0].mxu0
    %v694 = vadd.f32 0.0, %v693
    %v695 = vpop.f32.mrb[0].mxu0
    %696 = vdwg.mxu0
    %v697 = vsel %vm130, %v694, 0.0
    %v698 = vrot.slane %v697, 4
    %v699 = vadd.f32 %v697, %v698
    %v700 = vrot.slane %v699, 2
    %v701 = vadd.f32 %v699, %v700
    %v702 = vrot.slane %v701, 1
    %v703 = vadd.f32 %v701, %v702
    %v704 = vmul.f32 %v703, 0.125
    %v705 = vmul.f32 %v694, %v694
    %v706 = vsel %vm130, %v705, 0.0
    %v707 = vrot.slane %v706, 4
    %v708 = vadd.f32 %v706, %v707
    %v709 = vrot.slane %v708, 2
    %v710 = vadd.f32 %v708, %v709
    %v711 = vrot.slane %v710, 1
    %v712 = vadd.f32 %v710, %v711
    %v713 = vmul.f32 %v712, 0.125
    %v714 = vmul.f32 %v704, %v704
    %v715 = vsub.f32 %v713, %v714
    %v716 = vmax.f32 %v715, 0.0
    %v717 = vadd.f32 %v716, 1e-05
    %v718 = vrsqrt.pop %v717
    %v719 = vmul.f32 %v476, %v718
    %v720 = vmul.f32 %v704, %v719
    %v722 = vrot.slane %v720, 7
    %v724 = vsub.f32 %v476, %v722
    %v725 = vlaneseq
    %v726 = vshrl.u32 %v725, 7
    %v727 = vsub.s32 2, %v726
    %v728 = vrot.slane %v719, %v727
    %v729 = vmul.f32 %v694, %v728
    %v730 = vlaneseq
    %v731 = vshrl.u32 %v730, 7
    %v732 = vsub.s32 3, %v731
    %v733 = vrot.slane %v724, %v732
    %v734 = vadd.f32 %v729, %v733
    %v735 = vmax.f32 %v734, 0.0
    %s736 = scalar_lea.vmem %s3, 32
    %v737 = vld [vmem:[%s736] sm:$0xff]
    %v738 = vld [vmem:[%s736 + $0x8] sm:$0xff]
    %v739 = vld [vmem:[%s736 + $0x10] sm:$0xff]
    %v740 = vld [vmem:[%s736 + $0x18] sm:$0xff]
    %v742 = vsel %vm130, %v735, 0
    %744 = vmatprep.subr.mxu0 %v738
    %745 = vmatpush1.msra.mxu0 %v737
    %746 = vmatprep.subr.mxu0 %v740
    %747 = vmatpush1.msra.mxu0 %v739
    %748 = vmatprep.subr.mxu0 0.0
    %749 = vmatpush1.msra.mxu0 0.0
    %750 = vmatprep.subr.mxu0 0.0
    %751 = vmatpush1.msra.mxu0 0.0
    %752 = vmatprep.subr.mxu0 0.0
    %753 = vmatpush1.msra.mxu0 0.0
    %754 = vmatprep.subr.mxu0 0.0
    %755 = vmatpush1.msra.mxu0 0.0
    %756 = vmatprep.subr.mxu0 0.0
    %757 = vmatpush1.msra.mxu0 0.0
    %758 = vmatprep.subr.mxu0 0.0
    %759 = vmatpush1.msra.mxu0 0.0
    %760 = vmatprep.subr.mxu0 0.0
    %761 = vmatpush1.msra.mxu0 0.0
    %762 = vmatprep.subr.mxu0 0.0
    %763 = vmatpush1.msra.mxu0 0.0
    %764 = vmatprep.subr.mxu0 0.0
    %765 = vmatpush1.msra.mxu0 0.0
    %766 = vmatprep.subr.mxu0 0.0
    %767 = vmatpush1.msra.mxu0 0.0
    %768 = vmatprep.subr.mxu0 0.0
    %769 = vmatpush1.msra.mxu0 0.0
    %770 = vmatprep.subr.mxu0 0.0
    %771 = vmatpush1.msra.mxu0 0.0
    %772 = vmatprep.subr.mxu0 0.0
    %773 = vmatpush1.msra.mxu0 0.0
    %774 = vmatprep.subr.mxu0 0.0
    %775 = vmatpush1.msra.mxu0 0.0
    %776 = vmatprep.subr.mxu0 0.0
    %777 = vmatpush1.msra.mxu0 0.0
    %778 = vmatprep.subr.mxu0 0.0
    %779 = vmatpush1.msra.mxu0 0.0
    %780 = vmatprep.subr.mxu0 0.0
    %781 = vmatpush1.msra.mxu0 0.0
    %782 = vmatprep.subr.mxu0 0.0
    %783 = vmatpush1.msra.mxu0 0.0
    %784 = vmatprep.subr.mxu0 0.0
    %785 = vmatpush1.msra.mxu0 0.0
    %786 = vmatprep.subr.mxu0 0.0
    %787 = vmatpush1.msra.mxu0 0.0
    %788 = vmatprep.subr.mxu0 0.0
    %789 = vmatpush1.msra.mxu0 0.0
    %790 = vmatprep.subr.mxu0 0.0
    %791 = vmatpush1.msra.mxu0 0.0
    %792 = vmatprep.subr.mxu0 0.0
    %793 = vmatpush1.msra.mxu0 0.0
    %794 = vmatprep.subr.mxu0 0.0
    %795 = vmatpush1.msra.mxu0 0.0
    %796 = vmatprep.subr.mxu0 0.0
    %797 = vmatpush1.msra.mxu0 0.0
    %798 = vmatprep.subr.mxu0 0.0
    %799 = vmatpush1.msra.mxu0 0.0
    %800 = vmatprep.subr.mxu0 0.0
    %801 = vmatpush1.msra.mxu0 0.0
    %802 = vmatprep.subr.mxu0 0.0
    %803 = vmatpush1.msra.mxu0 0.0
    %804 = vmatprep.subr.mxu0 0.0
    %805 = vmatpush1.msra.mxu0 0.0
    %806 = vmatprep.subr.mxu0 0.0
    %807 = vmatpush1.msra.mxu0 0.0
    %808 = vmatprep.mubr.f32.mxu0 0.0
    %809 = vmatmul.mubr.f32.gmra.mrb[0].mxu0 %v742
    %v810 = vpop.f32.mrb[0].mxu0
    %v811 = vadd.f32 0.0, %v810
    %v812 = vpop.f32.mrb[0].mxu0
    %v813 = vadd.f32 0.0, %v812
    %814 = vdwg.mxu0
    %v815 = vrot.slane %v811, 4
    %v816 = vadd.f32 %v811, %v815
    %v817 = vrot.slane %v816, 2
    %v818 = vadd.f32 %v816, %v817
    %v819 = vrot.slane %v818, 1
    %v820 = vadd.f32 %v818, %v819
    %v821 = vrot.slane %v813, 4
    %v822 = vadd.f32 %v813, %v821
    %v823 = vrot.slane %v822, 2
    %v824 = vadd.f32 %v822, %v823
    %v825 = vrot.slane %v824, 1
    %v826 = vadd.f32 %v824, %v825
    %v827 = vmul.f32 %v820, 0.125
    %v828 = vmul.f32 %v826, 0.125
    %v829 = vmul.f32 %v811, %v811
    %v830 = vmul.f32 %v813, %v813
    %v831 = vrot.slane %v829, 4
    %v832 = vadd.f32 %v829, %v831
    %v833 = vrot.slane %v832, 2
    %v834 = vadd.f32 %v832, %v833
    %v835 = vrot.slane %v834, 1
    %v836 = vadd.f32 %v834, %v835
    %v837 = vrot.slane %v830, 4
    %v838 = vadd.f32 %v830, %v837
    %v839 = vrot.slane %v838, 2
    %v840 = vadd.f32 %v838, %v839
    %v841 = vrot.slane %v840, 1
    %v842 = vadd.f32 %v840, %v841
    %v843 = vmul.f32 %v836, 0.125
    %v844 = vmul.f32 %v842, 0.125
    %v845 = vmul.f32 %v827, %v827
    %v846 = vmul.f32 %v828, %v828
    %v847 = vsub.f32 %v843, %v845
    %v848 = vsub.f32 %v844, %v846
    %v849 = vmax.f32 %v847, 0.0
    %v850 = vmax.f32 %v848, 0.0
    %v851 = vadd.f32 %v849, 1e-05
    %v852 = vadd.f32 %v850, 1e-05
    %v853 = vrsqrt.pop %v851
    %v854 = vrsqrt.pop %v852
    %v857 = vcombine.low %v853, %v854
    %v859 = vunpack.c.l.s4 1983009808
    %v860 = vunpack.c.0.s8 %v859
    %v861 = vlaneseq
    %v862 = vshrl.u32 %v861, 7
    %v863 = vsub.s32 %v860, %v862
    %v864 = vrot.slane %v857, %v863
    %v866 = vmul.f32 %v478, %v864
    %v868 = vlaneseq
    %v869 = vshrl.u32 %v868, 7
    %v870 = vsub.s32 0, %v869
    %v871 = vrot.slane %v866, %v870
    %v872 = vlaneseq
    %v873 = vshrl.u32 %v872, 7
    %v874 = vsub.s32 2, %v873
    %v875 = vrot.slane %v866, %v874
    %v878 = vmul.f32 %v827, %v871
    %v879 = vmul.f32 %v828, %v875
    %v882 = vcombine.low %v878, %v879
    %v884 = vunpack.c.l.s4 1983009808
    %v885 = vunpack.c.0.s8 %v884
    %v886 = vlaneseq
    %v887 = vshrl.u32 %v886, 7
    %v888 = vsub.s32 %v885, %v887
    %v889 = vrot.slane %v882, %v888
    %v890 = vrot.slane %v889, 7
    %v892 = vsub.f32 %v478, %v890
    %v893 = vlaneseq
    %v894 = vshrl.u32 %v893, 7
    %v895 = vsub.s32 0, %v894
    %v896 = vrot.slane %v871, %v895
    %v897 = vlaneseq
    %v898 = vshrl.u32 %v897, 7
    %v899 = vsub.s32 0, %v898
    %v900 = vrot.slane %v875, %v899
    %v901 = vmul.f32 %v811, %v896
    %v902 = vmul.f32 %v813, %v900
    %v904 = vlaneseq
    %v905 = vshrl.u32 %v904, 7
    %v906 = vsub.s32 1, %v905
    %v907 = vrot.slane %v892, %v906
    %v908 = vlaneseq
    %v909 = vshrl.u32 %v908, 7
    %v910 = vsub.s32 3, %v909
    %v911 = vrot.slane %v892, %v910
    %v914 = vlaneseq
    %v915 = vshrl.u32 %v914, 7
    %v916 = vsub.s32 1, %v915
    %v917 = vrot.slane %v907, %v916
    %v918 = vlaneseq
    %v919 = vshrl.u32 %v918, 7
    %v920 = vsub.s32 1, %v919
    %v921 = vrot.slane %v911, %v920
    %v922 = vadd.f32 %v901, %v917
    %v923 = vadd.f32 %v902, %v921
    %v924 = vmax.f32 %v922, 0.0
    %v925 = vmax.f32 %v923, 0.0
    %v926 = vadd.f32 %v924, %v473
    %v927 = vadd.f32 %v925, %v474
    %s928 = scalar_lea.vmem %s4, 8
    %v929 = vld [vmem:[%s928] sm:$0xf]
    %s930 = scalar_lea.vmem %s5, 8
    %v931 = vld [vmem:[%s930] sm:$0xf]
    %s932 = scalar_lea.vmem %s1, 512
    %v933 = vld [vmem:[%s932] sm:$0xff]
    %v934 = vld [vmem:[%s932 + $0x8] sm:$0xff]
    %v935 = vld [vmem:[%s932 + $0x10] sm:$0xff]
    %v936 = vld [vmem:[%s932 + $0x18] sm:$0xff]
    %v937 = vld [vmem:[%s932 + $0x20] sm:$0xff]
    %v938 = vld [vmem:[%s932 + $0x28] sm:$0xff]
    %v939 = vld [vmem:[%s932 + $0x30] sm:$0xff]
    %v940 = vld [vmem:[%s932 + $0x38] sm:$0xff]
    %v941 = vld [vmem:[%s932 + $0x40] sm:$0xff]
    %v942 = vld [vmem:[%s932 + $0x48] sm:$0xff]
    %v943 = vld [vmem:[%s932 + $0x50] sm:$0xff]
    %v944 = vld [vmem:[%s932 + $0x58] sm:$0xff]
    %v945 = vld [vmem:[%s932 + $0x60] sm:$0xff]
    %v946 = vld [vmem:[%s932 + $0x68] sm:$0xff]
    %v947 = vld [vmem:[%s932 + $0x70] sm:$0xff]
    %v948 = vld [vmem:[%s932 + $0x78] sm:$0xff]
    %v949 = vld [vmem:[%s932 + $0x80] sm:$0xff]
    %v950 = vld [vmem:[%s932 + $0x88] sm:$0xff]
    %v951 = vld [vmem:[%s932 + $0x90] sm:$0xff]
    %v952 = vld [vmem:[%s932 + $0x98] sm:$0xff]
    %v953 = vld [vmem:[%s932 + $0xa0] sm:$0xff]
    %v954 = vld [vmem:[%s932 + $0xa8] sm:$0xff]
    %v955 = vld [vmem:[%s932 + $0xb0] sm:$0xff]
    %v956 = vld [vmem:[%s932 + $0xb8] sm:$0xff]
    %v957 = vld [vmem:[%s932 + $0xc0] sm:$0xff]
    %v958 = vld [vmem:[%s932 + $0xc8] sm:$0xff]
    %v959 = vld [vmem:[%s932 + $0xd0] sm:$0xff]
    %v960 = vld [vmem:[%s932 + $0xd8] sm:$0xff]
    %v961 = vld [vmem:[%s932 + $0xe0] sm:$0xff]
    %v962 = vld [vmem:[%s932 + $0xe8] sm:$0xff]
    %v963 = vld [vmem:[%s932 + $0xf0] sm:$0xff]
    %v964 = vld [vmem:[%s932 + $0xf8] sm:$0xff]
    %965 = vmatprep.subr.mxu0 0.0
    %966 = vmatpush1.msra.mxu0 %v933
    %967 = vmatprep.subr.mxu0 0.0
    %968 = vmatpush1.msra.mxu0 %v934
    %969 = vmatprep.subr.mxu0 0.0
    %970 = vmatpush1.msra.mxu0 %v935
    %971 = vmatprep.subr.mxu0 0.0
    %972 = vmatpush1.msra.mxu0 %v936
    %973 = vmatprep.subr.mxu0 0.0
    %974 = vmatpush1.msra.mxu0 %v937
    %975 = vmatprep.subr.mxu0 0.0
    %976 = vmatpush1.msra.mxu0 %v938
    %977 = vmatprep.subr.mxu0 0.0
    %978 = vmatpush1.msra.mxu0 %v939
    %979 = vmatprep.subr.mxu0 0.0
    %980 = vmatpush1.msra.mxu0 %v940
    %981 = vmatprep.subr.mxu0 0.0
    %982 = vmatpush1.msra.mxu0 %v941
    %983 = vmatprep.subr.mxu0 0.0
    %984 = vmatpush1.msra.mxu0 %v942
    %985 = vmatprep.subr.mxu0 0.0
    %986 = vmatpush1.msra.mxu0 %v943
    %987 = vmatprep.subr.mxu0 0.0
    %988 = vmatpush1.msra.mxu0 %v944
    %989 = vmatprep.subr.mxu0 0.0
    %990 = vmatpush1.msra.mxu0 %v945
    %991 = vmatprep.subr.mxu0 0.0
    %992 = vmatpush1.msra.mxu0 %v946
    %993 = vmatprep.subr.mxu0 0.0
    %994 = vmatpush1.msra.mxu0 %v947
    %995 = vmatprep.subr.mxu0 0.0
    %996 = vmatpush1.msra.mxu0 %v948
    %997 = vmatprep.subr.mxu0 0.0
    %998 = vmatpush1.msra.mxu0 %v949
    %999 = vmatprep.subr.mxu0 0.0
    %1000 = vmatpush1.msra.mxu0 %v950
    %1001 = vmatprep.subr.mxu0 0.0
    %1002 = vmatpush1.msra.mxu0 %v951
    %1003 = vmatprep.subr.mxu0 0.0
    %1004 = vmatpush1.msra.mxu0 %v952
    %1005 = vmatprep.subr.mxu0 0.0
    %1006 = vmatpush1.msra.mxu0 %v953
    %1007 = vmatprep.subr.mxu0 0.0
    %1008 = vmatpush1.msra.mxu0 %v954
    %1009 = vmatprep.subr.mxu0 0.0
    %1010 = vmatpush1.msra.mxu0 %v955
    %1011 = vmatprep.subr.mxu0 0.0
    %1012 = vmatpush1.msra.mxu0 %v956
    %1013 = vmatprep.subr.mxu0 0.0
    %1014 = vmatpush1.msra.mxu0 %v957
    %1015 = vmatprep.subr.mxu0 0.0
    %1016 = vmatpush1.msra.mxu0 %v958
    %1017 = vmatprep.subr.mxu0 0.0
    %1018 = vmatpush1.msra.mxu0 %v959
    %1019 = vmatprep.subr.mxu0 0.0
    %1020 = vmatpush1.msra.mxu0 %v960
    %1021 = vmatprep.subr.mxu0 0.0
    %1022 = vmatpush1.msra.mxu0 %v961
    %1023 = vmatprep.subr.mxu0 0.0
    %1024 = vmatpush1.msra.mxu0 %v962
    %1025 = vmatprep.subr.mxu0 0.0
    %1026 = vmatpush1.msra.mxu0 %v963
    %1027 = vmatprep.subr.mxu0 0.0
    %1028 = vmatpush1.msra.mxu0 %v964
    %1029 = vmatprep.mubr.f32.mxu0 %v927
    %1030 = vmatmul.mubr.f32.gmra.mrb[0].mxu0 %v926
    %v1031 = vpop.f32.mrb[0].mxu0
    %v1032 = vadd.f32 0.0, %v1031
    %v1033 = vpop.f32.mrb[0].mxu0
    %1034 = vdwg.mxu0
    %v1035 = vsel %vm130, %v1032, 0.0
    %v1036 = vrot.slane %v1035, 4
    %v1037 = vadd.f32 %v1035, %v1036
    %v1038 = vrot.slane %v1037, 2
    %v1039 = vadd.f32 %v1037, %v1038
    %v1040 = vrot.slane %v1039, 1
    %v1041 = vadd.f32 %v1039, %v1040
    %v1042 = vmul.f32 %v1041, 0.125
    %v1043 = vmul.f32 %v1032, %v1032
    %v1044 = vsel %vm130, %v1043, 0.0
    %v1045 = vrot.slane %v1044, 4
    %v1046 = vadd.f32 %v1044, %v1045
    %v1047 = vrot.slane %v1046, 2
    %v1048 = vadd.f32 %v1046, %v1047
    %v1049 = vrot.slane %v1048, 1
    %v1050 = vadd.f32 %v1048, %v1049
    %v1051 = vmul.f32 %v1050, 0.125
    %v1052 = vmul.f32 %v1042, %v1042
    %v1053 = vsub.f32 %v1051, %v1052
    %v1054 = vmax.f32 %v1053, 0.0
    %v1055 = vadd.f32 %v1054, 1e-05
    %v1056 = vrsqrt.pop %v1055
    %v1057 = vmul.f32 %v929, %v1056
    %v1058 = vmul.f32 %v1042, %v1057
    %v1060 = vrot.slane %v1058, 7
    %v1062 = vsub.f32 %v929, %v1060
    %v1063 = vlaneseq
    %v1064 = vshrl.u32 %v1063, 7
    %v1065 = vsub.s32 0, %v1064
    %v1066 = vrot.slane %v1057, %v1065
    %v1067 = vmul.f32 %v1032, %v1066
    %v1068 = vlaneseq
    %v1069 = vshrl.u32 %v1068, 7
    %v1070 = vsub.s32 1, %v1069
    %v1071 = vrot.slane %v1062, %v1070
    %v1072 = vadd.f32 %v1067, %v1071
    %v1073 = vmax.f32 %v1072, 0.0
    %s1074 = scalar_lea.vmem %s2, 32
    %v1075 = vld [vmem:[%s1074] sm:$0xff]
    %v1076 = vld [vmem:[%s1074 + $0x8] sm:$0xff]
    %v1078 = vsel %vm130, %v1073, 0
    %1080 = vmatprep.subr.mxu0 0.0
    %1081 = vmatpush1.msra.mxu0 %v1075
    %1082 = vmatprep.subr.mxu0 0.0
    %1083 = vmatpush1.msra.mxu0 %v1076
    %1084 = vmatprep.subr.mxu0 0.0
    %1085 = vmatpush1.msra.mxu0 0.0
    %1086 = vmatprep.subr.mxu0 0.0
    %1087 = vmatpush1.msra.mxu0 0.0
    %1088 = vmatprep.subr.mxu0 0.0
    %1089 = vmatpush1.msra.mxu0 0.0
    %1090 = vmatprep.subr.mxu0 0.0
    %1091 = vmatpush1.msra.mxu0 0.0
    %1092 = vmatprep.subr.mxu0 0.0
    %1093 = vmatpush1.msra.mxu0 0.0
    %1094 = vmatprep.subr.mxu0 0.0
    %1095 = vmatpush1.msra.mxu0 0.0
    %1096 = vmatprep.subr.mxu0 0.0
    %1097 = vmatpush1.msra.mxu0 0.0
    %1098 = vmatprep.subr.mxu0 0.0
    %1099 = vmatpush1.msra.mxu0 0.0
    %1100 = vmatprep.subr.mxu0 0.0
    %1101 = vmatpush1.msra.mxu0 0.0
    %1102 = vmatprep.subr.mxu0 0.0
    %1103 = vmatpush1.msra.mxu0 0.0
    %1104 = vmatprep.subr.mxu0 0.0
    %1105 = vmatpush1.msra.mxu0 0.0
    %1106 = vmatprep.subr.mxu0 0.0
    %1107 = vmatpush1.msra.mxu0 0.0
    %1108 = vmatprep.subr.mxu0 0.0
    %1109 = vmatpush1.msra.mxu0 0.0
    %1110 = vmatprep.subr.mxu0 0.0
    %1111 = vmatpush1.msra.mxu0 0.0
    %1112 = vmatprep.subr.mxu0 0.0
    %1113 = vmatpush1.msra.mxu0 0.0
    %1114 = vmatprep.subr.mxu0 0.0
    %1115 = vmatpush1.msra.mxu0 0.0
    %1116 = vmatprep.subr.mxu0 0.0
    %1117 = vmatpush1.msra.mxu0 0.0
    %1118 = vmatprep.subr.mxu0 0.0
    %1119 = vmatpush1.msra.mxu0 0.0
    %1120 = vmatprep.subr.mxu0 0.0
    %1121 = vmatpush1.msra.mxu0 0.0
    %1122 = vmatprep.subr.mxu0 0.0
    %1123 = vmatpush1.msra.mxu0 0.0
    %1124 = vmatprep.subr.mxu0 0.0
    %1125 = vmatpush1.msra.mxu0 0.0
    %1126 = vmatprep.subr.mxu0 0.0
    %1127 = vmatpush1.msra.mxu0 0.0
    %1128 = vmatprep.subr.mxu0 0.0
    %1129 = vmatpush1.msra.mxu0 0.0
    %1130 = vmatprep.subr.mxu0 0.0
    %1131 = vmatpush1.msra.mxu0 0.0
    %1132 = vmatprep.subr.mxu0 0.0
    %1133 = vmatpush1.msra.mxu0 0.0
    %1134 = vmatprep.subr.mxu0 0.0
    %1135 = vmatpush1.msra.mxu0 0.0
    %1136 = vmatprep.subr.mxu0 0.0
    %1137 = vmatpush1.msra.mxu0 0.0
    %1138 = vmatprep.subr.mxu0 0.0
    %1139 = vmatpush1.msra.mxu0 0.0
    %1140 = vmatprep.subr.mxu0 0.0
    %1141 = vmatpush1.msra.mxu0 0.0
    %1142 = vmatprep.subr.mxu0 0.0
    %1143 = vmatpush1.msra.mxu0 0.0
    %1144 = vmatprep.mubr.f32.mxu0 0.0
    %1145 = vmatmul.mubr.f32.gmra.mrb[0].mxu0 %v1078
    %v1146 = vpop.f32.mrb[0].mxu0
    %v1147 = vadd.f32 0.0, %v1146
    %v1148 = vpop.f32.mrb[0].mxu0
    %1149 = vdwg.mxu0
    %v1150 = vsel %vm130, %v1147, 0.0
    %v1151 = vrot.slane %v1150, 4
    %v1152 = vadd.f32 %v1150, %v1151
    %v1153 = vrot.slane %v1152, 2
    %v1154 = vadd.f32 %v1152, %v1153
    %v1155 = vrot.slane %v1154, 1
    %v1156 = vadd.f32 %v1154, %v1155
    %v1157 = vmul.f32 %v1156, 0.125
    %v1158 = vmul.f32 %v1147, %v1147
    %v1159 = vsel %vm130, %v1158, 0.0
    %v1160 = vrot.slane %v1159, 4
    %v1161 = vadd.f32 %v1159, %v1160
    %v1162 = vrot.slane %v1161, 2
    %v1163 = vadd.f32 %v1161, %v1162
    %v1164 = vrot.slane %v1163, 1
    %v1165 = vadd.f32 %v1163, %v1164
    %v1166 = vmul.f32 %v1165, 0.125
    %v1167 = vmul.f32 %v1157, %v1157
    %v1168 = vsub.f32 %v1166, %v1167
    %v1169 = vmax.f32 %v1168, 0.0
    %v1170 = vadd.f32 %v1169, 1e-05
    %v1171 = vrsqrt.pop %v1170
    %v1172 = vmul.f32 %v929, %v1171
    %v1173 = vmul.f32 %v1157, %v1172
    %v1175 = vrot.slane %v1173, 7
    %v1177 = vsub.f32 %v929, %v1175
    %v1178 = vlaneseq
    %v1179 = vshrl.u32 %v1178, 7
    %v1180 = vsub.s32 2, %v1179
    %v1181 = vrot.slane %v1172, %v1180
    %v1182 = vmul.f32 %v1147, %v1181
    %v1183 = vlaneseq
    %v1184 = vshrl.u32 %v1183, 7
    %v1185 = vsub.s32 3, %v1184
    %v1186 = vrot.slane %v1177, %v1185
    %v1187 = vadd.f32 %v1182, %v1186
    %v1188 = vmax.f32 %v1187, 0.0
    %s1189 = scalar_lea.vmem %s3, 64
    %v1190 = vld [vmem:[%s1189] sm:$0xff]
    %v1191 = vld [vmem:[%s1189 + $0x8] sm:$0xff]
    %v1192 = vld [vmem:[%s1189 + $0x10] sm:$0xff]
    %v1193 = vld [vmem:[%s1189 + $0x18] sm:$0xff]
    %v1195 = vsel %vm130, %v1188, 0
    %1197 = vmatprep.subr.mxu0 %v1191
    %1198 = vmatpush1.msra.mxu0 %v1190
    %1199 = vmatprep.subr.mxu0 %v1193
    %1200 = vmatpush1.msra.mxu0 %v1192
    %1201 = vmatprep.subr.mxu0 0.0
    %1202 = vmatpush1.msra.mxu0 0.0
    %1203 = vmatprep.subr.mxu0 0.0
    %1204 = vmatpush1.msra.mxu0 0.0
    %1205 = vmatprep.subr.mxu0 0.0
    %1206 = vmatpush1.msra.mxu0 0.0
    %1207 = vmatprep.subr.mxu0 0.0
    %1208 = vmatpush1.msra.mxu0 0.0
    %1209 = vmatprep.subr.mxu0 0.0
    %1210 = vmatpush1.msra.mxu0 0.0
    %1211 = vmatprep.subr.mxu0 0.0
    %1212 = vmatpush1.msra.mxu0 0.0
    %1213 = vmatprep.subr.mxu0 0.0
    %1214 = vmatpush1.msra.mxu0 0.0
    %1215 = vmatprep.subr.mxu0 0.0
    %1216 = vmatpush1.msra.mxu0 0.0
    %1217 = vmatprep.subr.mxu0 0.0
    %1218 = vmatpush1.msra.mxu0 0.0
    %1219 = vmatprep.subr.mxu0 0.0
    %1220 = vmatpush1.msra.mxu0 0.0
    %1221 = vmatprep.subr.mxu0 0.0
    %1222 = vmatpush1.msra.mxu0 0.0
    %1223 = vmatprep.subr.mxu0 0.0
    %1224 = vmatpush1.msra.mxu0 0.0
    %1225 = vmatprep.subr.mxu0 0.0
    %1226 = vmatpush1.msra.mxu0 0.0
    %1227 = vmatprep.subr.mxu0 0.0
    %1228 = vmatpush1.msra.mxu0 0.0
    %1229 = vmatprep.subr.mxu0 0.0
    %1230 = vmatpush1.msra.mxu0 0.0
    %1231 = vmatprep.subr.mxu0 0.0
    %1232 = vmatpush1.msra.mxu0 0.0
    %1233 = vmatprep.subr.mxu0 0.0
    %1234 = vmatpush1.msra.mxu0 0.0
    %1235 = vmatprep.subr.mxu0 0.0
    %1236 = vmatpush1.msra.mxu0 0.0
    %1237 = vmatprep.subr.mxu0 0.0
    %1238 = vmatpush1.msra.mxu0 0.0
    %1239 = vmatprep.subr.mxu0 0.0
    %1240 = vmatpush1.msra.mxu0 0.0
    %1241 = vmatprep.subr.mxu0 0.0
    %1242 = vmatpush1.msra.mxu0 0.0
    %1243 = vmatprep.subr.mxu0 0.0
    %1244 = vmatpush1.msra.mxu0 0.0
    %1245 = vmatprep.subr.mxu0 0.0
    %1246 = vmatpush1.msra.mxu0 0.0
    %1247 = vmatprep.subr.mxu0 0.0
    %1248 = vmatpush1.msra.mxu0 0.0
    %1249 = vmatprep.subr.mxu0 0.0
    %1250 = vmatpush1.msra.mxu0 0.0
    %1251 = vmatprep.subr.mxu0 0.0
    %1252 = vmatpush1.msra.mxu0 0.0
    %1253 = vmatprep.subr.mxu0 0.0
    %1254 = vmatpush1.msra.mxu0 0.0
    %1255 = vmatprep.subr.mxu0 0.0
    %1256 = vmatpush1.msra.mxu0 0.0
    %1257 = vmatprep.subr.mxu0 0.0
    %1258 = vmatpush1.msra.mxu0 0.0
    %1259 = vmatprep.subr.mxu0 0.0
    %1260 = vmatpush1.msra.mxu0 0.0
    %1261 = vmatprep.mubr.f32.mxu0 0.0
    %1262 = vmatmul.mubr.f32.gmra.mrb[0].mxu0 %v1195
    %v1263 = vpop.f32.mrb[0].mxu0
    %v1264 = vadd.f32 0.0, %v1263
    %v1265 = vpop.f32.mrb[0].mxu0
    %v1266 = vadd.f32 0.0, %v1265
    %1267 = vdwg.mxu0
    %v1268 = vrot.slane %v1264, 4
    %v1269 = vadd.f32 %v1264, %v1268
    %v1270 = vrot.slane %v1269, 2
    %v1271 = vadd.f32 %v1269, %v1270
    %v1272 = vrot.slane %v1271, 1
    %v1273 = vadd.f32 %v1271, %v1272
    %v1274 = vrot.slane %v1266, 4
    %v1275 = vadd.f32 %v1266, %v1274
    %v1276 = vrot.slane %v1275, 2
    %v1277 = vadd.f32 %v1275, %v1276
    %v1278 = vrot.slane %v1277, 1
    %v1279 = vadd.f32 %v1277, %v1278
    %v1280 = vmul.f32 %v1273, 0.125
    %v1281 = vmul.f32 %v1279, 0.125
    %v1282 = vmul.f32 %v1264, %v1264
    %v1283 = vmul.f32 %v1266, %v1266
    %v1284 = vrot.slane %v1282, 4
    %v1285 = vadd.f32 %v1282, %v1284
    %v1286 = vrot.slane %v1285, 2
    %v1287 = vadd.f32 %v1285, %v1286
    %v1288 = vrot.slane %v1287, 1
    %v1289 = vadd.f32 %v1287, %v1288
    %v1290 = vrot.slane %v1283, 4
    %v1291 = vadd.f32 %v1283, %v1290
    %v1292 = vrot.slane %v1291, 2
    %v1293 = vadd.f32 %v1291, %v1292
    %v1294 = vrot.slane %v1293, 1
    %v1295 = vadd.f32 %v1293, %v1294
    %v1296 = vmul.f32 %v1289, 0.125
    %v1297 = vmul.f32 %v1295, 0.125
    %v1298 = vmul.f32 %v1280, %v1280
    %v1299 = vmul.f32 %v1281, %v1281
    %v1300 = vsub.f32 %v1296, %v1298
    %v1301 = vsub.f32 %v1297, %v1299
    %v1302 = vmax.f32 %v1300, 0.0
    %v1303 = vmax.f32 %v1301, 0.0
    %v1304 = vadd.f32 %v1302, 1e-05
    %v1305 = vadd.f32 %v1303, 1e-05
    %v1306 = vrsqrt.pop %v1304
    %v1307 = vrsqrt.pop %v1305
    %v1310 = vcombine.low %v1306, %v1307
    %v1312 = vunpack.c.l.s4 1983009808
    %v1313 = vunpack.c.0.s8 %v1312
    %v1314 = vlaneseq
    %v1315 = vshrl.u32 %v1314, 7
    %v1316 = vsub.s32 %v1313, %v1315
    %v1317 = vrot.slane %v1310, %v1316
    %v1319 = vmul.f32 %v931, %v1317
    %v1321 = vlaneseq
    %v1322 = vshrl.u32 %v1321, 7
    %v1323 = vsub.s32 0, %v1322
    %v1324 = vrot.slane %v1319, %v1323
    %v1325 = vlaneseq
    %v1326 = vshrl.u32 %v1325, 7
    %v1327 = vsub.s32 2, %v1326
    %v1328 = vrot.slane %v1319, %v1327
    %v1331 = vmul.f32 %v1280, %v1324
    %v1332 = vmul.f32 %v1281, %v1328
    %v1335 = vcombine.low %v1331, %v1332
    %v1337 = vunpack.c.l.s4 1983009808
    %v1338 = vunpack.c.0.s8 %v1337
    %v1339 = vlaneseq
    %v1340 = vshrl.u32 %v1339, 7
    %v1341 = vsub.s32 %v1338, %v1340
    %v1342 = vrot.slane %v1335, %v1341
    %v1343 = vrot.slane %v1342, 7
    %v1345 = vsub.f32 %v931, %v1343
    %v1346 = vlaneseq
    %v1347 = vshrl.u32 %v1346, 7
    %v1348 = vsub.s32 0, %v1347
    %v1349 = vrot.slane %v1324, %v1348
    %v1350 = vlaneseq
    %v1351 = vshrl.u32 %v1350, 7
    %v1352 = vsub.s32 0, %v1351
    %v1353 = vrot.slane %v1328, %v1352
    %v1354 = vmul.f32 %v1264, %v1349
    %v1355 = vmul.f32 %v1266, %v1353
    %v1357 = vlaneseq
    %v1358 = vshrl.u32 %v1357, 7
    %v1359 = vsub.s32 1, %v1358
    %v1360 = vrot.slane %v1345, %v1359
    %v1361 = vlaneseq
    %v1362 = vshrl.u32 %v1361, 7
    %v1363 = vsub.s32 3, %v1362
    %v1364 = vrot.slane %v1345, %v1363
    %v1367 = vlaneseq
    %v1368 = vshrl.u32 %v1367, 7
    %v1369 = vsub.s32 1, %v1368
    %v1370 = vrot.slane %v1360, %v1369
    %v1371 = vlaneseq
    %v1372 = vshrl.u32 %v1371, 7
    %v1373 = vsub.s32 1, %v1372
    %v1374 = vrot.slane %v1364, %v1373
    %v1375 = vadd.f32 %v1354, %v1370
    %v1376 = vadd.f32 %v1355, %v1374
    %v1377 = vmax.f32 %v1375, 0.0
    %v1378 = vmax.f32 %v1376, 0.0
    %v1379 = vadd.f32 %v1377, %v926
    %v1380 = vadd.f32 %v1378, %v927
    %s1381 = scalar_lea.vmem %s4, 12
    %v1382 = vld [vmem:[%s1381] sm:$0xf]
    %s1383 = scalar_lea.vmem %s5, 12
    %v1384 = vld [vmem:[%s1383] sm:$0xf]
    %s1385 = scalar_lea.vmem %s1, 768
    %v1386 = vld [vmem:[%s1385] sm:$0xff]
    %v1387 = vld [vmem:[%s1385 + $0x8] sm:$0xff]
    %v1388 = vld [vmem:[%s1385 + $0x10] sm:$0xff]
    %v1389 = vld [vmem:[%s1385 + $0x18] sm:$0xff]
    %v1390 = vld [vmem:[%s1385 + $0x20] sm:$0xff]
    %v1391 = vld [vmem:[%s1385 + $0x28] sm:$0xff]
    %v1392 = vld [vmem:[%s1385 + $0x30] sm:$0xff]
    %v1393 = vld [vmem:[%s1385 + $0x38] sm:$0xff]
    %v1394 = vld [vmem:[%s1385 + $0x40] sm:$0xff]
    %v1395 = vld [vmem:[%s1385 + $0x48] sm:$0xff]
    %v1396 = vld [vmem:[%s1385 + $0x50] sm:$0xff]
    %v1397 = vld [vmem:[%s1385 + $0x58] sm:$0xff]
    %v1398 = vld [vmem:[%s1385 + $0x60] sm:$0xff]
    %v1399 = vld [vmem:[%s1385 + $0x68] sm:$0xff]
    %v1400 = vld [vmem:[%s1385 + $0x70] sm:$0xff]
    %v1401 = vld [vmem:[%s1385 + $0x78] sm:$0xff]
    %v1402 = vld [vmem:[%s1385 + $0x80] sm:$0xff]
    %v1403 = vld [vmem:[%s1385 + $0x88] sm:$0xff]
    %v1404 = vld [vmem:[%s1385 + $0x90] sm:$0xff]
    %v1405 = vld [vmem:[%s1385 + $0x98] sm:$0xff]
    %v1406 = vld [vmem:[%s1385 + $0xa0] sm:$0xff]
    %v1407 = vld [vmem:[%s1385 + $0xa8] sm:$0xff]
    %v1408 = vld [vmem:[%s1385 + $0xb0] sm:$0xff]
    %v1409 = vld [vmem:[%s1385 + $0xb8] sm:$0xff]
    %v1410 = vld [vmem:[%s1385 + $0xc0] sm:$0xff]
    %v1411 = vld [vmem:[%s1385 + $0xc8] sm:$0xff]
    %v1412 = vld [vmem:[%s1385 + $0xd0] sm:$0xff]
    %v1413 = vld [vmem:[%s1385 + $0xd8] sm:$0xff]
    %v1414 = vld [vmem:[%s1385 + $0xe0] sm:$0xff]
    %v1415 = vld [vmem:[%s1385 + $0xe8] sm:$0xff]
    %v1416 = vld [vmem:[%s1385 + $0xf0] sm:$0xff]
    %v1417 = vld [vmem:[%s1385 + $0xf8] sm:$0xff]
    %1418 = vmatprep.subr.mxu0 0.0
    %1419 = vmatpush1.msra.mxu0 %v1386
    %1420 = vmatprep.subr.mxu0 0.0
    %1421 = vmatpush1.msra.mxu0 %v1387
    %1422 = vmatprep.subr.mxu0 0.0
    %1423 = vmatpush1.msra.mxu0 %v1388
    %1424 = vmatprep.subr.mxu0 0.0
    %1425 = vmatpush1.msra.mxu0 %v1389
    %1426 = vmatprep.subr.mxu0 0.0
    %1427 = vmatpush1.msra.mxu0 %v1390
    %1428 = vmatprep.subr.mxu0 0.0
    %1429 = vmatpush1.msra.mxu0 %v1391
    %1430 = vmatprep.subr.mxu0 0.0
    %1431 = vmatpush1.msra.mxu0 %v1392
    %1432 = vmatprep.subr.mxu0 0.0
    %1433 = vmatpush1.msra.mxu0 %v1393
    %1434 = vmatprep.subr.mxu0 0.0
    %1435 = vmatpush1.msra.mxu0 %v1394
    %1436 = vmatprep.subr.mxu0 0.0
    %1437 = vmatpush1.msra.mxu0 %v1395
    %1438 = vmatprep.subr.mxu0 0.0
    %1439 = vmatpush1.msra.mxu0 %v1396
    %1440 = vmatprep.subr.mxu0 0.0
    %1441 = vmatpush1.msra.mxu0 %v1397
    %1442 = vmatprep.subr.mxu0 0.0
    %1443 = vmatpush1.msra.mxu0 %v1398
    %1444 = vmatprep.subr.mxu0 0.0
    %1445 = vmatpush1.msra.mxu0 %v1399
    %1446 = vmatprep.subr.mxu0 0.0
    %1447 = vmatpush1.msra.mxu0 %v1400
    %1448 = vmatprep.subr.mxu0 0.0
    %1449 = vmatpush1.msra.mxu0 %v1401
    %1450 = vmatprep.subr.mxu0 0.0
    %1451 = vmatpush1.msra.mxu0 %v1402
    %1452 = vmatprep.subr.mxu0 0.0
    %1453 = vmatpush1.msra.mxu0 %v1403
    %1454 = vmatprep.subr.mxu0 0.0
    %1455 = vmatpush1.msra.mxu0 %v1404
    %1456 = vmatprep.subr.mxu0 0.0
    %1457 = vmatpush1.msra.mxu0 %v1405
    %1458 = vmatprep.subr.mxu0 0.0
    %1459 = vmatpush1.msra.mxu0 %v1406
    %1460 = vmatprep.subr.mxu0 0.0
    %1461 = vmatpush1.msra.mxu0 %v1407
    %1462 = vmatprep.subr.mxu0 0.0
    %1463 = vmatpush1.msra.mxu0 %v1408
    %1464 = vmatprep.subr.mxu0 0.0
    %1465 = vmatpush1.msra.mxu0 %v1409
    %1466 = vmatprep.subr.mxu0 0.0
    %1467 = vmatpush1.msra.mxu0 %v1410
    %1468 = vmatprep.subr.mxu0 0.0
    %1469 = vmatpush1.msra.mxu0 %v1411
    %1470 = vmatprep.subr.mxu0 0.0
    %1471 = vmatpush1.msra.mxu0 %v1412
    %1472 = vmatprep.subr.mxu0 0.0
    %1473 = vmatpush1.msra.mxu0 %v1413
    %1474 = vmatprep.subr.mxu0 0.0
    %1475 = vmatpush1.msra.mxu0 %v1414
    %1476 = vmatprep.subr.mxu0 0.0
    %1477 = vmatpush1.msra.mxu0 %v1415
    %1478 = vmatprep.subr.mxu0 0.0
    %1479 = vmatpush1.msra.mxu0 %v1416
    %1480 = vmatprep.subr.mxu0 0.0
    %1481 = vmatpush1.msra.mxu0 %v1417
    %1482 = vmatprep.mubr.f32.mxu0 %v1380
    %1483 = vmatmul.mubr.f32.gmra.mrb[0].mxu0 %v1379
    %v1484 = vpop.f32.mrb[0].mxu0
    %v1485 = vadd.f32 0.0, %v1484
    %v1486 = vpop.f32.mrb[0].mxu0
    %1487 = vdwg.mxu0
    %v1488 = vsel %vm130, %v1485, 0.0
    %v1489 = vrot.slane %v1488, 4
    %v1490 = vadd.f32 %v1488, %v1489
    %v1491 = vrot.slane %v1490, 2
    %v1492 = vadd.f32 %v1490, %v1491
    %v1493 = vrot.slane %v1492, 1
    %v1494 = vadd.f32 %v1492, %v1493
    %v1495 = vmul.f32 %v1494, 0.125
    %v1496 = vmul.f32 %v1485, %v1485
    %v1497 = vsel %vm130, %v1496, 0.0
    %v1498 = vrot.slane %v1497, 4
    %v1499 = vadd.f32 %v1497, %v1498
    %v1500 = vrot.slane %v1499, 2
    %v1501 = vadd.f32 %v1499, %v1500
    %v1502 = vrot.slane %v1501, 1
    %v1503 = vadd.f32 %v1501, %v1502
    %v1504 = vmul.f32 %v1503, 0.125
    %v1505 = vmul.f32 %v1495, %v1495
    %v1506 = vsub.f32 %v1504, %v1505
    %v1507 = vmax.f32 %v1506, 0.0
    %v1508 = vadd.f32 %v1507, 1e-05
    %v1509 = vrsqrt.pop %v1508
    %v1510 = vmul.f32 %v1382, %v1509
    %v1511 = vmul.f32 %v1495, %v1510
    %v1513 = vrot.slane %v1511, 7
    %v1515 = vsub.f32 %v1382, %v1513
    %v1516 = vlaneseq
    %v1517 = vshrl.u32 %v1516, 7
    %v1518 = vsub.s32 0, %v1517
    %v1519 = vrot.slane %v1510, %v1518
    %v1520 = vmul.f32 %v1485, %v1519
    %v1521 = vlaneseq
    %v1522 = vshrl.u32 %v1521, 7
    %v1523 = vsub.s32 1, %v1522
    %v1524 = vrot.slane %v1515, %v1523
    %v1525 = vadd.f32 %v1520, %v1524
    %v1526 = vmax.f32 %v1525, 0.0
    %s1527 = scalar_lea.vmem %s2, 48
    %v1528 = vld [vmem:[%s1527] sm:$0xff]
    %v1529 = vld [vmem:[%s1527 + $0x8] sm:$0xff]
    %v1531 = vsel %vm130, %v1526, 0
    %1533 = vmatprep.subr.mxu0 0.0
    %1534 = vmatpush1.msra.mxu0 %v1528
    %1535 = vmatprep.subr.mxu0 0.0
    %1536 = vmatpush1.msra.mxu0 %v1529
    %1537 = vmatprep.subr.mxu0 0.0
    %1538 = vmatpush1.msra.mxu0 0.0
    %1539 = vmatprep.subr.mxu0 0.0
    %1540 = vmatpush1.msra.mxu0 0.0
    %1541 = vmatprep.subr.mxu0 0.0
    %1542 = vmatpush1.msra.mxu0 0.0
    %1543 = vmatprep.subr.mxu0 0.0
    %1544 = vmatpush1.msra.mxu0 0.0
    %1545 = vmatprep.subr.mxu0 0.0
    %1546 = vmatpush1.msra.mxu0 0.0
    %1547 = vmatprep.subr.mxu0 0.0
    %1548 = vmatpush1.msra.mxu0 0.0
    %1549 = vmatprep.subr.mxu0 0.0
    %1550 = vmatpush1.msra.mxu0 0.0
    %1551 = vmatprep.subr.mxu0 0.0
    %1552 = vmatpush1.msra.mxu0 0.0
    %1553 = vmatprep.subr.mxu0 0.0
    %1554 = vmatpush1.msra.mxu0 0.0
    %1555 = vmatprep.subr.mxu0 0.0
    %1556 = vmatpush1.msra.mxu0 0.0
    %1557 = vmatprep.subr.mxu0 0.0
    %1558 = vmatpush1.msra.mxu0 0.0
    %1559 = vmatprep.subr.mxu0 0.0
    %1560 = vmatpush1.msra.mxu0 0.0
    %1561 = vmatprep.subr.mxu0 0.0
    %1562 = vmatpush1.msra.mxu0 0.0
    %1563 = vmatprep.subr.mxu0 0.0
    %1564 = vmatpush1.msra.mxu0 0.0
    %1565 = vmatprep.subr.mxu0 0.0
    %1566 = vmatpush1.msra.mxu0 0.0
    %1567 = vmatprep.subr.mxu0 0.0
    %1568 = vmatpush1.msra.mxu0 0.0
    %1569 = vmatprep.subr.mxu0 0.0
    %1570 = vmatpush1.msra.mxu0 0.0
    %1571 = vmatprep.subr.mxu0 0.0
    %1572 = vmatpush1.msra.mxu0 0.0
    %1573 = vmatprep.subr.mxu0 0.0
    %1574 = vmatpush1.msra.mxu0 0.0
    %1575 = vmatprep.subr.mxu0 0.0
    %1576 = vmatpush1.msra.mxu0 0.0
    %1577 = vmatprep.subr.mxu0 0.0
    %1578 = vmatpush1.msra.mxu0 0.0
    %1579 = vmatprep.subr.mxu0 0.0
    %1580 = vmatpush1.msra.mxu0 0.0
    %1581 = vmatprep.subr.mxu0 0.0
    %1582 = vmatpush1.msra.mxu0 0.0
    %1583 = vmatprep.subr.mxu0 0.0
    %1584 = vmatpush1.msra.mxu0 0.0
    %1585 = vmatprep.subr.mxu0 0.0
    %1586 = vmatpush1.msra.mxu0 0.0
    %1587 = vmatprep.subr.mxu0 0.0
    %1588 = vmatpush1.msra.mxu0 0.0
    %1589 = vmatprep.subr.mxu0 0.0
    %1590 = vmatpush1.msra.mxu0 0.0
    %1591 = vmatprep.subr.mxu0 0.0
    %1592 = vmatpush1.msra.mxu0 0.0
    %1593 = vmatprep.subr.mxu0 0.0
    %1594 = vmatpush1.msra.mxu0 0.0
    %1595 = vmatprep.subr.mxu0 0.0
    %1596 = vmatpush1.msra.mxu0 0.0
    %1597 = vmatprep.mubr.f32.mxu0 0.0
    %1598 = vmatmul.mubr.f32.gmra.mrb[0].mxu0 %v1531
    %v1599 = vpop.f32.mrb[0].mxu0
    %v1600 = vadd.f32 0.0, %v1599
    %v1601 = vpop.f32.mrb[0].mxu0
    %1602 = vdwg.mxu0
    %v1603 = vsel %vm130, %v1600, 0.0
    %v1604 = vrot.slane %v1603, 4
    %v1605 = vadd.f32 %v1603, %v1604
    %v1606 = vrot.slane %v1605, 2
    %v1607 = vadd.f32 %v1605, %v1606
    %v1608 = vrot.slane %v1607, 1
    %v1609 = vadd.f32 %v1607, %v1608
    %v1610 = vmul.f32 %v1609, 0.125
    %v1611 = vmul.f32 %v1600, %v1600
    %v1612 = vsel %vm130, %v1611, 0.0
    %v1613 = vrot.slane %v1612, 4
    %v1614 = vadd.f32 %v1612, %v1613
    %v1615 = vrot.slane %v1614, 2
    %v1616 = vadd.f32 %v1614, %v1615
    %v1617 = vrot.slane %v1616, 1
    %v1618 = vadd.f32 %v1616, %v1617
    %v1619 = vmul.f32 %v1618, 0.125
    %v1620 = vmul.f32 %v1610, %v1610
    %v1621 = vsub.f32 %v1619, %v1620
    %v1622 = vmax.f32 %v1621, 0.0
    %v1623 = vadd.f32 %v1622, 1e-05
    %v1624 = vrsqrt.pop %v1623
    %v1625 = vmul.f32 %v1382, %v1624
    %v1626 = vmul.f32 %v1610, %v1625
    %v1628 = vrot.slane %v1626, 7
    %v1630 = vsub.f32 %v1382, %v1628
    %v1631 = vlaneseq
    %v1632 = vshrl.u32 %v1631, 7
    %v1633 = vsub.s32 2, %v1632
    %v1634 = vrot.slane %v1625, %v1633
    %v1635 = vmul.f32 %v1600, %v1634
    %v1636 = vlaneseq
    %v1637 = vshrl.u32 %v1636, 7
    %v1638 = vsub.s32 3, %v1637
    %v1639 = vrot.slane %v1630, %v1638
    %v1640 = vadd.f32 %v1635, %v1639
    %v1641 = vmax.f32 %v1640, 0.0
    %s1642 = scalar_lea.vmem %s3, 96
    %v1643 = vld [vmem:[%s1642] sm:$0xff]
    %v1644 = vld [vmem:[%s1642 + $0x8] sm:$0xff]
    %v1645 = vld [vmem:[%s1642 + $0x10] sm:$0xff]
    %v1646 = vld [vmem:[%s1642 + $0x18] sm:$0xff]
    %v1648 = vsel %vm130, %v1641, 0
    %1650 = vmatprep.subr.mxu0 %v1644
    %1651 = vmatpush1.msra.mxu0 %v1643
    %1652 = vmatprep.subr.mxu0 %v1646
    %1653 = vmatpush1.msra.mxu0 %v1645
    %1654 = vmatprep.subr.mxu0 0.0
    %1655 = vmatpush1.msra.mxu0 0.0
    %1656 = vmatprep.subr.mxu0 0.0
    %1657 = vmatpush1.msra.mxu0 0.0
    %1658 = vmatprep.subr.mxu0 0.0
    %1659 = vmatpush1.msra.mxu0 0.0
    %1660 = vmatprep.subr.mxu0 0.0
    %1661 = vmatpush1.msra.mxu0 0.0
    %1662 = vmatprep.subr.mxu0 0.0
    %1663 = vmatpush1.msra.mxu0 0.0
    %1664 = vmatprep.subr.mxu0 0.0
    %1665 = vmatpush1.msra.mxu0 0.0
    %1666 = vmatprep.subr.mxu0 0.0
    %1667 = vmatpush1.msra.mxu0 0.0
    %1668 = vmatprep.subr.mxu0 0.0
    %1669 = vmatpush1.msra.mxu0 0.0
    %1670 = vmatprep.subr.mxu0 0.0
    %1671 = vmatpush1.msra.mxu0 0.0
    %1672 = vmatprep.subr.mxu0 0.0
    %1673 = vmatpush1.msra.mxu0 0.0
    %1674 = vmatprep.subr.mxu0 0.0
    %1675 = vmatpush1.msra.mxu0 0.0
    %1676 = vmatprep.subr.mxu0 0.0
    %1677 = vmatpush1.msra.mxu0 0.0
    %1678 = vmatprep.subr.mxu0 0.0
    %1679 = vmatpush1.msra.mxu0 0.0
    %1680 = vmatprep.subr.mxu0 0.0
    %1681 = vmatpush1.msra.mxu0 0.0
    %1682 = vmatprep.subr.mxu0 0.0
    %1683 = vmatpush1.msra.mxu0 0.0
    %1684 = vmatprep.subr.mxu0 0.0
    %1685 = vmatpush1.msra.mxu0 0.0
    %1686 = vmatprep.subr.mxu0 0.0
    %1687 = vmatpush1.msra.mxu0 0.0
    %1688 = vmatprep.subr.mxu0 0.0
    %1689 = vmatpush1.msra.mxu0 0.0
    %1690 = vmatprep.subr.mxu0 0.0
    %1691 = vmatpush1.msra.mxu0 0.0
    %1692 = vmatprep.subr.mxu0 0.0
    %1693 = vmatpush1.msra.mxu0 0.0
    %1694 = vmatprep.subr.mxu0 0.0
    %1695 = vmatpush1.msra.mxu0 0.0
    %1696 = vmatprep.subr.mxu0 0.0
    %1697 = vmatpush1.msra.mxu0 0.0
    %1698 = vmatprep.subr.mxu0 0.0
    %1699 = vmatpush1.msra.mxu0 0.0
    %1700 = vmatprep.subr.mxu0 0.0
    %1701 = vmatpush1.msra.mxu0 0.0
    %1702 = vmatprep.subr.mxu0 0.0
    %1703 = vmatpush1.msra.mxu0 0.0
    %1704 = vmatprep.subr.mxu0 0.0
    %1705 = vmatpush1.msra.mxu0 0.0
    %1706 = vmatprep.subr.mxu0 0.0
    %1707 = vmatpush1.msra.mxu0 0.0
    %1708 = vmatprep.subr.mxu0 0.0
    %1709 = vmatpush1.msra.mxu0 0.0
    %1710 = vmatprep.subr.mxu0 0.0
    %1711 = vmatpush1.msra.mxu0 0.0
    %1712 = vmatprep.subr.mxu0 0.0
    %1713 = vmatpush1.msra.mxu0 0.0
    %1714 = vmatprep.mubr.f32.mxu0 0.0
    %1715 = vmatmul.mubr.f32.gmra.mrb[0].mxu0 %v1648
    %v1716 = vpop.f32.mrb[0].mxu0
    %v1717 = vadd.f32 0.0, %v1716
    %v1718 = vpop.f32.mrb[0].mxu0
    %v1719 = vadd.f32 0.0, %v1718
    %1720 = vdwg.mxu0
    %v1721 = vrot.slane %v1717, 4
    %v1722 = vadd.f32 %v1717, %v1721
    %v1723 = vrot.slane %v1722, 2
    %v1724 = vadd.f32 %v1722, %v1723
    %v1725 = vrot.slane %v1724, 1
    %v1726 = vadd.f32 %v1724, %v1725
    %v1727 = vrot.slane %v1719, 4
    %v1728 = vadd.f32 %v1719, %v1727
    %v1729 = vrot.slane %v1728, 2
    %v1730 = vadd.f32 %v1728, %v1729
    %v1731 = vrot.slane %v1730, 1
    %v1732 = vadd.f32 %v1730, %v1731
    %v1733 = vmul.f32 %v1726, 0.125
    %v1734 = vmul.f32 %v1732, 0.125
    %v1735 = vmul.f32 %v1717, %v1717
    %v1736 = vmul.f32 %v1719, %v1719
    %v1737 = vrot.slane %v1735, 4
    %v1738 = vadd.f32 %v1735, %v1737
    %v1739 = vrot.slane %v1738, 2
    %v1740 = vadd.f32 %v1738, %v1739
    %v1741 = vrot.slane %v1740, 1
    %v1742 = vadd.f32 %v1740, %v1741
    %v1743 = vrot.slane %v1736, 4
    %v1744 = vadd.f32 %v1736, %v1743
    %v1745 = vrot.slane %v1744, 2
    %v1746 = vadd.f32 %v1744, %v1745
    %v1747 = vrot.slane %v1746, 1
    %v1748 = vadd.f32 %v1746, %v1747
    %v1749 = vmul.f32 %v1742, 0.125
    %v1750 = vmul.f32 %v1748, 0.125
    %v1751 = vmul.f32 %v1733, %v1733
    %v1752 = vmul.f32 %v1734, %v1734
    %v1753 = vsub.f32 %v1749, %v1751
    %v1754 = vsub.f32 %v1750, %v1752
    %v1755 = vmax.f32 %v1753, 0.0
    %v1756 = vmax.f32 %v1754, 0.0
    %v1757 = vadd.f32 %v1755, 1e-05
    %v1758 = vadd.f32 %v1756, 1e-05
    %v1759 = vrsqrt.pop %v1757
    %v1760 = vrsqrt.pop %v1758
    %v1763 = vcombine.low %v1759, %v1760
    %v1765 = vunpack.c.l.s4 1983009808
    %v1766 = vunpack.c.0.s8 %v1765
    %v1767 = vlaneseq
    %v1768 = vshrl.u32 %v1767, 7
    %v1769 = vsub.s32 %v1766, %v1768
    %v1770 = vrot.slane %v1763, %v1769
    %v1772 = vmul.f32 %v1384, %v1770
    %v1774 = vlaneseq
    %v1775 = vshrl.u32 %v1774, 7
    %v1776 = vsub.s32 0, %v1775
    %v1777 = vrot.slane %v1772, %v1776
    %v1778 = vlaneseq
    %v1779 = vshrl.u32 %v1778, 7
    %v1780 = vsub.s32 2, %v1779
    %v1781 = vrot.slane %v1772, %v1780
    %v1784 = vmul.f32 %v1733, %v1777
    %v1785 = vmul.f32 %v1734, %v1781
    %v1788 = vcombine.low %v1784, %v1785
    %v1790 = vunpack.c.l.s4 1983009808
    %v1791 = vunpack.c.0.s8 %v1790
    %v1792 = vlaneseq
    %v1793 = vshrl.u32 %v1792, 7
    %v1794 = vsub.s32 %v1791, %v1793
    %v1795 = vrot.slane %v1788, %v1794
    %v1796 = vrot.slane %v1795, 7
    %v1798 = vsub.f32 %v1384, %v1796
    %v1799 = vlaneseq
    %v1800 = vshrl.u32 %v1799, 7
    %v1801 = vsub.s32 0, %v1800
    %v1802 = vrot.slane %v1777, %v1801
    %v1803 = vlaneseq
    %v1804 = vshrl.u32 %v1803, 7
    %v1805 = vsub.s32 0, %v1804
    %v1806 = vrot.slane %v1781, %v1805
    %v1807 = vmul.f32 %v1717, %v1802
    %v1808 = vmul.f32 %v1719, %v1806
    %v1810 = vlaneseq
    %v1811 = vshrl.u32 %v1810, 7
    %v1812 = vsub.s32 1, %v1811
    %v1813 = vrot.slane %v1798, %v1812
    %v1814 = vlaneseq
    %v1815 = vshrl.u32 %v1814, 7
    %v1816 = vsub.s32 3, %v1815
    %v1817 = vrot.slane %v1798, %v1816
    %v1820 = vlaneseq
    %v1821 = vshrl.u32 %v1820, 7
    %v1822 = vsub.s32 1, %v1821
    %v1823 = vrot.slane %v1813, %v1822
    %v1824 = vlaneseq
    %v1825 = vshrl.u32 %v1824, 7
    %v1826 = vsub.s32 1, %v1825
    %v1827 = vrot.slane %v1817, %v1826
    %v1828 = vadd.f32 %v1807, %v1823
    %v1829 = vadd.f32 %v1808, %v1827
    %v1830 = vmax.f32 %v1828, 0.0
    %v1831 = vmax.f32 %v1829, 0.0
    %v1832 = vadd.f32 %v1830, %v1379
    %v1833 = vadd.f32 %v1831, %v1380
    %1834 = vst [vmem:[#allocation2] sm:$0xff] %v1832
    %1835 = vst [vmem:[#allocation2 + $0x8] sm:$0xff] %v1833
    // Predicated region
    $region26: #{transformation.1} parent=1 // pred_check
      _
    $region27: #{transformation.1} parent=1 // pred_check_branch
      %1837 = sbr.rel (0) target = $region29
    $region28: #{transformation.1} parent=1 // pred_region
      %s1839 = ssub.s32 256, 256
      %1840 = vsyncadd [#allocation3], %s1839
      %s1842 = sshll.u32 [#allocation2], 4
      %s1843 = int_to_ptr.vmem [resolvable:$true] %s1842
      %1845 = dma.vmem_to_hbm [thread:$0]  %s1843, 256, %s6, [#allocation3]
    $region29: #{transformation.1} parent=1 // pred_fallthru
      _
    // Predicated region
    $region30: #{transformation.1} parent=1 // pred_check
      _
    $region31: #{transformation.1} parent=1 // pred_check_branch
      %1847 = sbr.rel (0) target = $region33
    $region32: #{transformation.1} parent=1 // pred_region
      %1848 = dma.done [#allocation3], 256
    $region33: #{transformation.1} parent=1 // pred_fallthru
      _
    %1849 = vsyncpa [#allocation3], 1

</llo_original>
